<compile_context>
chip_gen: v5e
topology: v5e:2x2
jax: 0.10.0
libtpu: 0.0.40
codegen_flags: <defaults>
</compile_context>

<pallas_src>
import functools

import jax
import jax.numpy as jnp
from jax.experimental import pallas as pl
from jax.experimental.pallas import tpu as pltpu


def _make_kernel(H, W, in_c, hid, K):
    Cin = in_c + hid
    Co = 4 * hid
    pad = K // 2
    HW = H * W

    def kernel(x_ref, h_ref, c_ref, w_ref, b_ref, h_out_ref, c_out_ref, comb_ref):
        # x_ref : (1, H, W, in_c)     input frame (NHWC block)
        # h_ref : (1, H, W, hid)      previous hidden state (NHWC block)
        # c_ref : (1, hid, H*W)       previous cell state, NCHW-flat (lane dense)
        # w_ref : (K*K*Cin, Co)       conv weight in im2col matmul form
        # b_ref : (Co, 1)             conv bias (broadcasts over lanes)
        # comb_ref: (H+2p, W+2p, Cin) VMEM scratch: zero-padded [x ; h]

        # ---- fused concat + "same" zero-padding, entirely in VMEM ----------
        comb_ref[...] = jnp.zeros_like(comb_ref)
        interior = jnp.concatenate([x_ref[0], h_ref[0]], axis=-1)   # (H, W, Cin)
        comb_ref[pad:pad + H, pad:pad + W, :] = interior
        comb = comb_ref[...]                                        # (Hp, Wp, Cin)

        # ---- im2col slab built once, then a single MXU matmul (K = K*K*Cin)
        patches = [
            comb[dy:dy + H, dx:dx + W, :].reshape(HW, Cin)
            for dy in range(K) for dx in range(K)
        ]
        slab = jnp.concatenate(patches, axis=1)                     # (HW, K*K*Cin)
        gates_hw = jnp.dot(slab, w_ref[...],
                           preferred_element_type=jnp.float32)      # (HW, Co)

        # ---- one in-kernel transpose -> lane-dense (Co, HW) gate math ------
        gates = gates_hw.T + b_ref[...]                             # (Co, HW)

        i = jax.nn.sigmoid(gates[0 * hid:1 * hid, :])
        f = jax.nn.sigmoid(gates[1 * hid:2 * hid, :])
        g = jnp.tanh(gates[2 * hid:3 * hid, :])
        o = jax.nn.sigmoid(gates[3 * hid:4 * hid, :])

        c_prev = c_ref[0]                                           # (hid, HW)
        c_next = f * c_prev + i * g
        h_next = o * jnp.tanh(c_next)

        c_out_ref[0] = c_next                                       # lane-dense stores
        h_out_ref[0] = h_next

    return kernel


@functools.partial(jax.jit, static_argnames=("k",))
def conv_lstm_cell(x, h, c, weight, bias, *, k=3):
    """ConvLSTMCell forward.

    Args (PyTorch NCHW conventions):
      x      : (B, in_c,  H, W)
      h, c   : (B, hid_c, H, W)
      weight : (4*hid_c, in_c + hid_c, k, k)   (torch Conv2d weight layout)
      bias   : (4*hid_c,)
    Returns:
      (h_next, c_next) each (B, hid_c, H, W)
    """
    B, in_c, H, W = x.shape
    hid = h.shape[1]
    Cin = in_c + hid
    Co = 4 * hid
    HW = H * W
    pad = k // 2
    Hp, Wp = H + 2 * pad, W + 2 * pad

    # Minimal XLA glue: two small input transposes (x, h -> NHWC so the im2col
    # reshape stays channel-minor). c and both outputs use free NCHW-flat
    # reshapes only -- no concat, no pad, no output transposes in XLA.
    x_nhwc = jnp.transpose(x, (0, 2, 3, 1))
    h_nhwc = jnp.transpose(h, (0, 2, 3, 1))
    c_flat = c.reshape(B, hid, HW)

    # torch (Co, Cin, kh, kw) -> (kh, kw, Cin, Co) -> (kh*kw*Cin, Co)
    w_mat = jnp.transpose(weight, (2, 3, 1, 0)).reshape(k * k * Cin, Co)
    b_mat = bias.reshape(Co, 1)

    kernel = _make_kernel(H, W, in_c, hid, k)

    h_next, c_next = pl.pallas_call(
        kernel,
        out_shape=(
            jax.ShapeDtypeStruct((B, hid, HW), jnp.float32),
            jax.ShapeDtypeStruct((B, hid, HW), jnp.float32),
        ),
        grid_spec=pltpu.PrefetchScalarGridSpec(
            num_scalar_prefetch=0,
            grid=(B,),
            in_specs=[
                pl.BlockSpec((1, H, W, in_c), lambda b: (b, 0, 0, 0)),
                pl.BlockSpec((1, H, W, hid), lambda b: (b, 0, 0, 0)),
                pl.BlockSpec((1, hid, HW), lambda b: (b, 0, 0)),
                pl.BlockSpec((k * k * Cin, Co), lambda b: (0, 0)),
                pl.BlockSpec((Co, 1), lambda b: (0, 0)),
            ],
            out_specs=[
                pl.BlockSpec((1, hid, HW), lambda b: (b, 0, 0)),
                pl.BlockSpec((1, hid, HW), lambda b: (b, 0, 0)),
            ],
            scratch_shapes=[pltpu.VMEM((Hp, Wp, Cin), jnp.float32)],
        ),
        compiler_params=pltpu.CompilerParams(
            dimension_semantics=("parallel",),
        ),
        input_output_aliases={2: 1},   # reuse c_prev's HBM buffer for c_next
    )(x_nhwc, h_nhwc, c_flat, w_mat, b_mat)

    # Free reshapes back to NCHW (no transposes).
    return h_next.reshape(B, hid, H, W), c_next.reshape(B, hid, H, W)


def _reference(x, h, c, weight, bias, k=3):
    """Pure-JAX reference mirroring the PyTorch module (NCHW)."""
    combined = jnp.concatenate([x, h], axis=1)
    gates = jax.lax.conv_general_dilated(
        combined, weight,
        window_strides=(1, 1), padding=[(k // 2, k // 2)] * 2,
        dimension_numbers=("NCHW", "OIHW", "NCHW"),
    ) + bias.reshape(1, -1, 1, 1)
    hid = h.shape[1]
    i, f, g, o = (gates[:, j * hid:(j + 1) * hid] for j in range(4))
    i, f, o = map(jax.nn.sigmoid, (i, f, o))
    g = jnp.tanh(g)
    c_next = f * c + i * g
    h_next = o * jnp.tanh(c_next)
    return h_next, c_next


if __name__ == "__main__":
    B, in_c, hid_c, H, W, k = 2, 4, 8, 16, 16, 3

    key = jax.random.PRNGKey(0)
    kx, kh, kc, kw, kb = jax.random.split(key, 5)

    x = jax.random.normal(kx, (B, in_c, H, W), jnp.float32)
    h = jax.random.normal(kh, (B, hid_c, H, W), jnp.float32)
    c = jax.random.normal(kc, (B, hid_c, H, W), jnp.float32)

    # Deterministic synthetic Conv2d parameters (shapes from nn.Conv2d init).
    fan_in = (in_c + hid_c) * k * k
    bound = 1.0 / (fan_in ** 0.5)
    weight = jax.random.uniform(kw, (4 * hid_c, in_c + hid_c, k, k),
                                jnp.float32, -bound, bound)
    bias = jax.random.uniform(kb, (4 * hid_c,), jnp.float32, -bound, bound)

    h_next, c_next = conv_lstm_cell(x, h, c, weight, bias, k=k)
    jax.block_until_ready((h_next, c_next))

    h_ref, c_ref = _reference(x, h, c, weight, bias, k=k)
    assert jnp.allclose(h_next, h_ref, atol=1e-4, rtol=1e-4), "h mismatch"
    assert jnp.allclose(c_next, c_ref, atol=1e-4, rtol=1e-4), "c mismatch"

    print("KERNEL_OK")
</pallas_src>

<mosaic_0001>
module attributes {stable_mosaic.version = 11 : i64} {
  func.func @kernel(%arg0: i32, %arg1: memref<1x16x16x4xf32, #tpu.memory_space<vmem>>, %arg2: memref<1x16x16x8xf32, #tpu.memory_space<vmem>>, %arg3: memref<1x8x256xf32, #tpu.memory_space<vmem>>, %arg4: memref<108x32xf32, #tpu.memory_space<vmem>>, %arg5: memref<32x1xf32, #tpu.memory_space<vmem>>, %arg6: memref<1x8x256xf32, #tpu.memory_space<vmem>>, %arg7: memref<1x8x256xf32, #tpu.memory_space<vmem>>, %arg8: memref<18x18x12xf32, #tpu.memory_space<vmem>>) attributes {dimension_semantics = [#tpu.dimension_semantics<parallel>], iteration_bounds = array<i64: 2>, scalar_prefetch = 0 : i64, scratch_operands = 1 : i64, tpu.core_type = #tpu.core_type<tc>, window_params = [{transform_indices = @transform_0, window_bounds = array<i64: 1, 16, 16, 4>}, {transform_indices = @transform_1, window_bounds = array<i64: 1, 16, 16, 8>}, {transform_indices = @transform_2, window_bounds = array<i64: 1, 8, 256>}, {pipeline_mode = #tpu.pipeline_mode<synchronous>, transform_indices = @transform_3, window_bounds = array<i64: 108, 32>}, {pipeline_mode = #tpu.pipeline_mode<synchronous>, transform_indices = @transform_4, window_bounds = array<i64: 32, 1>}, {transform_indices = @transform_5, window_bounds = array<i64: 1, 8, 256>}, {transform_indices = @transform_6, window_bounds = array<i64: 1, 8, 256>}]} {
    %cst = arith.constant 0.000000e+00 : f32
    %0 = vector.broadcast %cst : f32 to vector<18x18x12xf32>
    %c0 = arith.constant 0 : index
    %c0_0 = arith.constant 0 : index
    %c0_1 = arith.constant 0 : index
    %1 = vector.load %arg8[%c0, %c0_0, %c0_1] : memref<18x18x12xf32, #tpu.memory_space<vmem>>, vector<18x18x12xf32>
    tpu.vector_store %arg8[%c0, %c0_0, %c0_1], %0 {strides = array<i32>} : memref<18x18x12xf32, #tpu.memory_space<vmem>>, vector<18x18x12xf32>,
    %c0_2 = arith.constant 0 : index
    %c0_3 = arith.constant 0 : index
    %c0_4 = arith.constant 0 : index
    %c0_5 = arith.constant 0 : index
    %2 = vector.load %arg1[%c0_2, %c0_3, %c0_4, %c0_5] : memref<1x16x16x4xf32, #tpu.memory_space<vmem>>, vector<1x16x16x4xf32>
    %3 = vector.shape_cast %2 : vector<1x16x16x4xf32> to vector<16x16x4xf32>
    %c0_6 = arith.constant 0 : index
    %c0_7 = arith.constant 0 : index
    %c0_8 = arith.constant 0 : index
    %c0_9 = arith.constant 0 : index
    %4 = vector.load %arg2[%c0_6, %c0_7, %c0_8, %c0_9] : memref<1x16x16x8xf32, #tpu.memory_space<vmem>>, vector<1x16x16x8xf32>
    %5 = vector.shape_cast %4 : vector<1x16x16x8xf32> to vector<16x16x8xf32>
    %6 = tpu.concatenate %3, %5 in 2 : vector<16x16x4xf32>, vector<16x16x8xf32> -> vector<16x16x12xf32>
    %c1 = arith.constant 1 : index
    %c1_10 = arith.constant 1 : index
    %c0_11 = arith.constant 0 : index
    %7 = vector.load %arg8[%c1, %c1_10, %c0_11] : memref<18x18x12xf32, #tpu.memory_space<vmem>>, vector<16x16x12xf32>
    tpu.vector_store %arg8[%c1, %c1_10, %c0_11], %6 {strides = array<i32>} : memref<18x18x12xf32, #tpu.memory_space<vmem>>, vector<16x16x12xf32>,
    %c0_12 = arith.constant 0 : index
    %c0_13 = arith.constant 0 : index
    %c0_14 = arith.constant 0 : index
    %8 = vector.load %arg8[%c0_12, %c0_13, %c0_14] : memref<18x18x12xf32, #tpu.memory_space<vmem>>, vector<18x18x12xf32>
    %9 = vector.extract_strided_slice %8 {offsets = [0, 0, 0], sizes = [16, 16, 12], strides = [1, 1, 1]} : vector<18x18x12xf32> to vector<16x16x12xf32>
    %10 = vector.shape_cast %9 : vector<16x16x12xf32> to vector<256x12xf32>
    %11 = vector.extract_strided_slice %8 {offsets = [0, 1, 0], sizes = [16, 16, 12], strides = [1, 1, 1]} : vector<18x18x12xf32> to vector<16x16x12xf32>
    %12 = vector.shape_cast %11 : vector<16x16x12xf32> to vector<256x12xf32>
    %13 = vector.extract_strided_slice %8 {offsets = [0, 2, 0], sizes = [16, 16, 12], strides = [1, 1, 1]} : vector<18x18x12xf32> to vector<16x16x12xf32>
    %14 = vector.shape_cast %13 : vector<16x16x12xf32> to vector<256x12xf32>
    %15 = vector.extract_strided_slice %8 {offsets = [1, 0, 0], sizes = [16, 16, 12], strides = [1, 1, 1]} : vector<18x18x12xf32> to vector<16x16x12xf32>
    %16 = vector.shape_cast %15 : vector<16x16x12xf32> to vector<256x12xf32>
    %17 = vector.extract_strided_slice %8 {offsets = [1, 1, 0], sizes = [16, 16, 12], strides = [1, 1, 1]} : vector<18x18x12xf32> to vector<16x16x12xf32>
    %18 = vector.shape_cast %17 : vector<16x16x12xf32> to vector<256x12xf32>
    %19 = vector.extract_strided_slice %8 {offsets = [1, 2, 0], sizes = [16, 16, 12], strides = [1, 1, 1]} : vector<18x18x12xf32> to vector<16x16x12xf32>
    %20 = vector.shape_cast %19 : vector<16x16x12xf32> to vector<256x12xf32>
    %21 = vector.extract_strided_slice %8 {offsets = [2, 0, 0], sizes = [16, 16, 12], strides = [1, 1, 1]} : vector<18x18x12xf32> to vector<16x16x12xf32>
    %22 = vector.shape_cast %21 : vector<16x16x12xf32> to vector<256x12xf32>
    %23 = vector.extract_strided_slice %8 {offsets = [2, 1, 0], sizes = [16, 16, 12], strides = [1, 1, 1]} : vector<18x18x12xf32> to vector<16x16x12xf32>
    %24 = vector.shape_cast %23 : vector<16x16x12xf32> to vector<256x12xf32>
    %25 = vector.extract_strided_slice %8 {offsets = [2, 2, 0], sizes = [16, 16, 12], strides = [1, 1, 1]} : vector<18x18x12xf32> to vector<16x16x12xf32>
    %26 = vector.shape_cast %25 : vector<16x16x12xf32> to vector<256x12xf32>
    %27 = tpu.concatenate %10, %12, %14, %16, %18, %20, %22, %24, %26 in 1 : vector<256x12xf32>, vector<256x12xf32>, vector<256x12xf32>, vector<256x12xf32>, vector<256x12xf32>, vector<256x12xf32>, vector<256x12xf32>, vector<256x12xf32>, vector<256x12xf32> -> vector<256x108xf32>
    %c0_15 = arith.constant 0 : index
    %c0_16 = arith.constant 0 : index
    %28 = vector.load %arg4[%c0_15, %c0_16] : memref<108x32xf32, #tpu.memory_space<vmem>>, vector<108x32xf32>
    %cst_17 = arith.constant dense<0.000000e+00> : vector<256x32xf32>
    %29 = tpu.matmul %27, %28, %cst_17 {dimension_numbers = #tpu.dot_dimension_numbers<[1], [0], [0], [1], [0, 0, 1, 1], [], []>} : vector<256x108xf32>, vector<108x32xf32>, vector<256x32xf32> -> vector<256x32xf32>
    %30 = tpu.transpose %29, [1, 0] : vector<256x32xf32> -> vector<32x256xf32>
    %c0_18 = arith.constant 0 : index
    %c0_19 = arith.constant 0 : index
    %31 = vector.load %arg5[%c0_18, %c0_19] : memref<32x1xf32, #tpu.memory_space<vmem>>, vector<32x1xf32>
    %32 = vector.broadcast %31 : vector<32x1xf32> to vector<32x256xf32>
    %33 = arith.addf %30, %32 : vector<32x256xf32>
    %34 = vector.extract_strided_slice %33 {offsets = [0, 0], sizes = [8, 256], strides = [1, 1]} : vector<32x256xf32> to vector<8x256xf32>
    %35 = arith.negf %34 : vector<8x256xf32>
    %36 = math.exp %35 : vector<8x256xf32>
    %cst_20 = arith.constant 1.000000e+00 : f32
    %37 = vector.broadcast %cst_20 : f32 to vector<8x256xf32>
    %38 = arith.addf %37, %36 : vector<8x256xf32>
    %39 = arith.divf %37, %38 : vector<8x256xf32>
    %40 = vector.extract_strided_slice %33 {offsets = [8, 0], sizes = [8, 256], strides = [1, 1]} : vector<32x256xf32> to vector<8x256xf32>
    %41 = arith.negf %40 : vector<8x256xf32>
    %42 = math.exp %41 : vector<8x256xf32>
    %cst_21 = arith.constant 1.000000e+00 : f32
    %43 = vector.broadcast %cst_21 : f32 to vector<8x256xf32>
    %44 = arith.addf %43, %42 : vector<8x256xf32>
    %45 = arith.divf %43, %44 : vector<8x256xf32>
    %46 = vector.extract_strided_slice %33 {offsets = [16, 0], sizes = [8, 256], strides = [1, 1]} : vector<32x256xf32> to vector<8x256xf32>
    %47 = math.tanh %46 : vector<8x256xf32>
    %48 = vector.extract_strided_slice %33 {offsets = [24, 0], sizes = [8, 256], strides = [1, 1]} : vector<32x256xf32> to vector<8x256xf32>
    %49 = arith.negf %48 : vector<8x256xf32>
    %50 = math.exp %49 : vector<8x256xf32>
    %cst_22 = arith.constant 1.000000e+00 : f32
    %51 = vector.broadcast %cst_22 : f32 to vector<8x256xf32>
    %52 = arith.addf %51, %50 : vector<8x256xf32>
    %53 = arith.divf %51, %52 : vector<8x256xf32>
    %c0_23 = arith.constant 0 : index
    %c0_24 = arith.constant 0 : index
    %c0_25 = arith.constant 0 : index
    %54 = vector.load %arg3[%c0_23, %c0_24, %c0_25] : memref<1x8x256xf32, #tpu.memory_space<vmem>>, vector<1x8x256xf32>
    %55 = vector.shape_cast %54 : vector<1x8x256xf32> to vector<8x256xf32>
    %56 = arith.mulf %45, %55 : vector<8x256xf32>
    %57 = arith.mulf %39, %47 : vector<8x256xf32>
    %58 = arith.addf %56, %57 : vector<8x256xf32>
    %59 = math.tanh %58 : vector<8x256xf32>
    %60 = arith.mulf %53, %59 : vector<8x256xf32>
    %c0_26 = arith.constant 0 : index
    %c0_27 = arith.constant 0 : index
    %c0_28 = arith.constant 0 : index
    %61 = vector.load %arg7[%c0_26, %c0_27, %c0_28] : memref<1x8x256xf32, #tpu.memory_space<vmem>>, vector<1x8x256xf32>
    %62 = vector.shape_cast %61 : vector<1x8x256xf32> to vector<8x256xf32>
    %63 = vector.shape_cast %58 : vector<8x256xf32> to vector<1x8x256xf32>
    tpu.vector_store %arg7[%c0_26, %c0_27, %c0_28], %63 {strides = array<i32>} : memref<1x8x256xf32, #tpu.memory_space<vmem>>, vector<1x8x256xf32>,
    %c0_29 = arith.constant 0 : index
    %c0_30 = arith.constant 0 : index
    %c0_31 = arith.constant 0 : index
    %64 = vector.load %arg6[%c0_29, %c0_30, %c0_31] : memref<1x8x256xf32, #tpu.memory_space<vmem>>, vector<1x8x256xf32>
    %65 = vector.shape_cast %64 : vector<1x8x256xf32> to vector<8x256xf32>
    %66 = vector.shape_cast %60 : vector<8x256xf32> to vector<1x8x256xf32>
    tpu.vector_store %arg6[%c0_29, %c0_30, %c0_31], %66 {strides = array<i32>} : memref<1x8x256xf32, #tpu.memory_space<vmem>>, vector<1x8x256xf32>,
    return
  }
  func.func @transform_0(%arg0: i32) -> (i32, i32, i32, i32) {
    %c0_i32 = arith.constant 0 : i32
    %c0_i32_0 = arith.constant 0 : i32
    %c0_i32_1 = arith.constant 0 : i32
    %c0_i32_2 = arith.constant 0 : i32
    return %arg0, %c0_i32, %c0_i32_0, %c0_i32_1 : i32, i32, i32, i32
  }
  func.func @transform_1(%arg0: i32) -> (i32, i32, i32, i32) {
    %c0_i32 = arith.constant 0 : i32
    %c0_i32_0 = arith.constant 0 : i32
    %c0_i32_1 = arith.constant 0 : i32
    %c0_i32_2 = arith.constant 0 : i32
    return %arg0, %c0_i32, %c0_i32_0, %c0_i32_1 : i32, i32, i32, i32
  }
  func.func @transform_2(%arg0: i32) -> (i32, i32, i32) {
    %c0_i32 = arith.constant 0 : i32
    %c0_i32_0 = arith.constant 0 : i32
    %c0_i32_1 = arith.constant 0 : i32
    return %arg0, %c0_i32, %c0_i32_0 : i32, i32, i32
  }
  func.func @transform_3(%arg0: i32) -> (i32, i32) {
    %c0_i32 = arith.constant 0 : i32
    %c0_i32_0 = arith.constant 0 : i32
    %c0_i32_1 = arith.constant 0 : i32
    return %c0_i32, %c0_i32_0 : i32, i32
  }
  func.func @transform_4(%arg0: i32) -> (i32, i32) {
    %c0_i32 = arith.constant 0 : i32
    %c0_i32_0 = arith.constant 0 : i32
    %c0_i32_1 = arith.constant 0 : i32
    return %c0_i32, %c0_i32_0 : i32, i32
  }
  func.func @transform_5(%arg0: i32) -> (i32, i32, i32) {
    %c0_i32 = arith.constant 0 : i32
    %c0_i32_0 = arith.constant 0 : i32
    %c0_i32_1 = arith.constant 0 : i32
    return %arg0, %c0_i32, %c0_i32_0 : i32, i32, i32
  }
  func.func @transform_6(%arg0: i32) -> (i32, i32, i32) {
    %c0_i32 = arith.constant 0 : i32
    %c0_i32_0 = arith.constant 0 : i32
    %c0_i32_1 = arith.constant 0 : i32
    return %arg0, %c0_i32, %c0_i32_0 : i32, i32, i32
  }
}

</mosaic_0001>

<llo_original>
// kernel: conv_lstm_cell.1
$region0: #{conv_lstm_cell.1}
  #allocation0 [shape = 'u32[]', space=smem, size = 0x4, offset = 0x4, fixed_abs, tag = 'smem constant byte address 0x4 - core index']
  #allocation1 [shape = 'u32[72,128]{1,0:T(1,128)}', space=vmem, size = 0x9000, scoped, tag = 'internal scratch']
  #allocation2 [shape = 'f32[18,18,12]{2,1,0:T(8,128)}', space=vmem, size = 0x36000, scoped, tag = 'scratch operand']
  %s0 = inlined_call_operand.vmem [shape: f32[2,16,16,4], index: 0, kind: input, shape index: {}]
  %s1 = inlined_call_operand.vmem [shape: f32[2,16,16,8], index: 1, kind: input, shape index: {}]
  %s2 = inlined_call_operand.vmem [shape: f32[2,8,256], index: 2, kind: input, shape index: {}, may-alias: {2,6}]
  %s3 = inlined_call_operand.vmem [shape: f32[108,32], index: 3, kind: input, shape index: {}]
  %s4 = inlined_call_operand.vmem [shape: f32[32,1], index: 4, kind: input, shape index: {}]
  %s5 = inlined_call_operand.vmem [shape: f32[2,8,256], index: 5, kind: output, shape index: {0}]
  %s6 = inlined_call_operand.vmem [shape: f32[2,8,256], index: 6, kind: output, shape index: {1}, may-alias: {2,6}]
  %7 = xla_tuple %s5, %s6
  %s8 = sld [smem:[#allocation0]]
  $region61: #{conv_lstm_cell.1} parent=0
    _
  %s10 = ssub.s32 1, %s8
  %s11 = scalar_select 0, %s10, %s8
  loop: start=0, step=1, limit=4
  $region2: #{conv_lstm_cell.1} parent=0 // loop_pre_header
    _
  $region3: #{conv_lstm_cell.1} parent=0 // loop_header
    %s13 = sphi 0, %s17
    %p14 = scmp.ge.s32.totalorder %s13, 4
    %s23 = sphi 0, %s25
    %s26 = sphi 0, %s23
    %s27 = sphi 0, %s26
    %s43 = sphi 0, %s27
    %s49 = sphi 0, %s51
    %s52 = sphi 0, %s49
    %s53 = sphi 0, %s52
    %s69 = sphi 0, %s53
    %s75 = sphi 0, %s77
    %s78 = sphi 0, %s75
    %s79 = sphi 0, %s78
    %s95 = sphi 0, %s79
    %s99 = sphi 0, %s99
    %s101 = sphi 0, %s99
    %s102 = sphi 0, %s101
    %s116 = sphi 0, %s102
    %s120 = sphi 0, %s120
    %s122 = sphi 0, %s120
    %s123 = sphi 0, %s122
    %s137 = sphi 0, %s123
    %s143 = sphi 0, %s145
    %s146 = sphi 0, %s143
    %s147 = sphi 0, %s146
    %s163 = sphi 0, %s147
    %s169 = sphi 0, %s171
    %s172 = sphi 0, %s169
    %s173 = sphi 0, %s172
    %s189 = sphi 0, %s173
  $region4: #{conv_lstm_cell.1} parent=0 // loop_header_branch
    %16 = sbr.rel (%p14) target = $region8
  $region5: #{conv_lstm_cell.1} parent=0 // loop_body
    %s18 = ssub.s32 %s13, 1
    %s19 = ssub.s32 %s13, 2
    %s20 = sadd.s32 %s13, 1
    %s21 = ssub.s32 %s13, %s20
    %p22 = scmp.eq.s32.totalorder %s21, 0
    %s24 = sadd.s32 %s23, 1
    %s25 = scalar_select %p22, %s23, %s24
    %p28 = pneg %p22
    %p29 = scmp.eq.s32.totalorder %s13, 1
    %p30 = por %p28, %p29
    %p31 = scmp.ne.s32.totalorder %s23, %s26
    %p32 = scmp.eq.s32.totalorder %s13, 0
    %p33 = por %p31, %p32
    %p34 = scmp.ne.s32.totalorder %s23, %s26
    %p35 = scmp.eq.s32.totalorder %s18, 1
    %p36 = por %p34, %p35
    %p37 = scmp.ne.s32.totalorder %s26, %s27
    %p38 = scmp.eq.s32.totalorder %s18, 0
    %p39 = por %p37, %p38
    %p40 = scmp.ne.s32.totalorder %s26, %s27
    %p41 = scmp.eq.s32.totalorder %s19, 1
    %p42 = por %p40, %p41
    %p44 = scmp.ne.s32.totalorder %s27, %s43
    %p45 = scmp.eq.s32.totalorder %s19, 0
    %p46 = por %p44, %p45
    %s47 = ssub.s32 %s13, %s20
    %p48 = scmp.eq.s32.totalorder %s47, 0
    %s50 = sadd.s32 %s49, 1
    %s51 = scalar_select %p48, %s49, %s50
    %p54 = pneg %p48
    %p55 = scmp.eq.s32.totalorder %s13, 1
    %p56 = por %p54, %p55
    %p57 = scmp.ne.s32.totalorder %s49, %s52
    %p58 = scmp.eq.s32.totalorder %s13, 0
    %p59 = por %p57, %p58
    %p60 = scmp.ne.s32.totalorder %s49, %s52
    %p61 = scmp.eq.s32.totalorder %s18, 1
    %p62 = por %p60, %p61
    %p63 = scmp.ne.s32.totalorder %s52, %s53
    %p64 = scmp.eq.s32.totalorder %s18, 0
    %p65 = por %p63, %p64
    %p66 = scmp.ne.s32.totalorder %s52, %s53
    %p67 = scmp.eq.s32.totalorder %s19, 1
    %p68 = por %p66, %p67
    %p70 = scmp.ne.s32.totalorder %s53, %s69
    %p71 = scmp.eq.s32.totalorder %s19, 0
    %p72 = por %p70, %p71
    %s73 = ssub.s32 %s13, %s20
    %p74 = scmp.eq.s32.totalorder %s73, 0
    %s76 = sadd.s32 %s75, 1
    %s77 = scalar_select %p74, %s75, %s76
    %p80 = pneg %p74
    %p81 = scmp.eq.s32.totalorder %s13, 1
    %p82 = por %p80, %p81
    %p83 = scmp.ne.s32.totalorder %s75, %s78
    %p84 = scmp.eq.s32.totalorder %s13, 0
    %p85 = por %p83, %p84
    %p86 = scmp.ne.s32.totalorder %s75, %s78
    %p87 = scmp.eq.s32.totalorder %s18, 1
    %p88 = por %p86, %p87
    %p89 = scmp.ne.s32.totalorder %s78, %s79
    %p90 = scmp.eq.s32.totalorder %s18, 0
    %p91 = por %p89, %p90
    %p92 = scmp.ne.s32.totalorder %s78, %s79
    %p93 = scmp.eq.s32.totalorder %s19, 1
    %p94 = por %p92, %p93
    %p96 = scmp.ne.s32.totalorder %s79, %s95
    %p97 = scmp.eq.s32.totalorder %s19, 0
    %p98 = por %p96, %p97
    %s100 = sadd.s32 %s99, 1
    %p103 = scmp.eq.s32.totalorder %s13, 1
    %p104 = scmp.ne.s32.totalorder %s99, %s101
    %p105 = scmp.eq.s32.totalorder %s13, 0
    %p106 = por %p104, %p105
    %p107 = scmp.ne.s32.totalorder %s99, %s101
    %p108 = scmp.eq.s32.totalorder %s18, 1
    %p109 = por %p107, %p108
    %p110 = scmp.ne.s32.totalorder %s101, %s102
    %p111 = scmp.eq.s32.totalorder %s18, 0
    %p112 = por %p110, %p111
    %p113 = scmp.ne.s32.totalorder %s101, %s102
    %p114 = scmp.eq.s32.totalorder %s19, 1
    %p115 = por %p113, %p114
    %p117 = scmp.ne.s32.totalorder %s102, %s116
    %p118 = scmp.eq.s32.totalorder %s19, 0
    %p119 = por %p117, %p118
    %s121 = sadd.s32 %s120, 1
    %p124 = scmp.eq.s32.totalorder %s13, 1
    %p125 = scmp.ne.s32.totalorder %s120, %s122
    %p126 = scmp.eq.s32.totalorder %s13, 0
    %p127 = por %p125, %p126
    %p128 = scmp.ne.s32.totalorder %s120, %s122
    %p129 = scmp.eq.s32.totalorder %s18, 1
    %p130 = por %p128, %p129
    %p131 = scmp.ne.s32.totalorder %s122, %s123
    %p132 = scmp.eq.s32.totalorder %s18, 0
    %p133 = por %p131, %p132
    %p134 = scmp.ne.s32.totalorder %s122, %s123
    %p135 = scmp.eq.s32.totalorder %s19, 1
    %p136 = por %p134, %p135
    %p138 = scmp.ne.s32.totalorder %s123, %s137
    %p139 = scmp.eq.s32.totalorder %s19, 0
    %p140 = por %p138, %p139
    %s141 = ssub.s32 %s13, %s20
    %p142 = scmp.eq.s32.totalorder %s141, 0
    %s144 = sadd.s32 %s143, 1
    %s145 = scalar_select %p142, %s143, %s144
    %p148 = pneg %p142
    %p149 = scmp.eq.s32.totalorder %s13, 1
    %p150 = por %p148, %p149
    %p151 = scmp.ne.s32.totalorder %s143, %s146
    %p152 = scmp.eq.s32.totalorder %s13, 0
    %p153 = por %p151, %p152
    %p154 = scmp.ne.s32.totalorder %s143, %s146
    %p155 = scmp.eq.s32.totalorder %s18, 1
    %p156 = por %p154, %p155
    %p157 = scmp.ne.s32.totalorder %s146, %s147
    %p158 = scmp.eq.s32.totalorder %s18, 0
    %p159 = por %p157, %p158
    %p160 = scmp.ne.s32.totalorder %s146, %s147
    %p161 = scmp.eq.s32.totalorder %s19, 1
    %p162 = por %p160, %p161
    %p164 = scmp.ne.s32.totalorder %s147, %s163
    %p165 = scmp.eq.s32.totalorder %s19, 0
    %p166 = por %p164, %p165
    %s167 = ssub.s32 %s13, %s20
    %p168 = scmp.eq.s32.totalorder %s167, 0
    %s170 = sadd.s32 %s169, 1
    %s171 = scalar_select %p168, %s169, %s170
    %p174 = pneg %p168
    %p175 = scmp.eq.s32.totalorder %s13, 1
    %p176 = por %p174, %p175
    %p177 = scmp.ne.s32.totalorder %s169, %s172
    %p178 = scmp.eq.s32.totalorder %s13, 0
    %p179 = por %p177, %p178
    %p180 = scmp.ne.s32.totalorder %s169, %s172
    %p181 = scmp.eq.s32.totalorder %s18, 1
    %p182 = por %p180, %p181
    %p183 = scmp.ne.s32.totalorder %s172, %s173
    %p184 = scmp.eq.s32.totalorder %s18, 0
    %p185 = por %p183, %p184
    %p186 = scmp.ne.s32.totalorder %s172, %s173
    %p187 = scmp.eq.s32.totalorder %s19, 1
    %p188 = por %p186, %p187
    %p190 = scmp.ne.s32.totalorder %s173, %s189
    %p191 = scmp.eq.s32.totalorder %s19, 0
    %p192 = por %p190, %p191
    %p193 = scmp.le.s32.totalorder 1, %s13
    %p194 = scmp.lt.s32.totalorder %s13, 3
    %p195 = pnand %p193, %p194
    %p196 = pneg %p195
    // Predicated region
    $region9: #{conv_lstm_cell.1} parent=5 // pred_check
      _
    $region10: #{conv_lstm_cell.1} parent=5 // pred_check_branch
      %198 = sbr.rel (%p195) target = $region12
    $region11: #{conv_lstm_cell.1} parent=5 // pred_region
      %s199 = ssub.s32 %s13, 1
      // Predicated region
      $region13: #{conv_lstm_cell.1} parent=11 // pred_check
        %p200 = pneg %p112
      $region14: #{conv_lstm_cell.1} parent=11 // pred_check_branch
        %202 = sbr.rel (%p200) target = $region16
      $region15: #{conv_lstm_cell.1} parent=11 // pred_region
        _
      $region16: #{conv_lstm_cell.1} parent=11 // pred_fallthru
        _
      // Predicated region
      $region17: #{conv_lstm_cell.1} parent=11 // pred_check
        %p203 = pneg %p133
      $region18: #{conv_lstm_cell.1} parent=11 // pred_check_branch
        %205 = sbr.rel (%p203) target = $region20
      $region19: #{conv_lstm_cell.1} parent=11 // pred_region
        _
      $region20: #{conv_lstm_cell.1} parent=11 // pred_fallthru
        _
    $region12: #{conv_lstm_cell.1} parent=5 // pred_fallthru
      _
    %p206 = scmp.lt.s32.totalorder %s13, 2
    // Predicated region
    $region21: #{conv_lstm_cell.1} parent=5 // pred_check
      %p207 = pneg %p206
    $region22: #{conv_lstm_cell.1} parent=5 // pred_check_branch
      %209 = sbr.rel (%p207) target = $region24
    $region23: #{conv_lstm_cell.1} parent=5 // pred_region
      // Predicated region
      $region25: #{conv_lstm_cell.1} parent=23 // pred_check
        %p210 = pneg %p33
      $region26: #{conv_lstm_cell.1} parent=23 // pred_check_branch
        %212 = sbr.rel (%p210) target = $region28
      $region27: #{conv_lstm_cell.1} parent=23 // pred_region
        %p213 = scmp.lt.s32.totalorder %s13, 1
        %s214 = scalar_select %p213, %s13, 1
        %s215 = smul.addr %s214, 32
        %s216 = smul.addr %s215, 8
        %s217 = scalar_lea.vmem %s0, %s216
      $region28: #{conv_lstm_cell.1} parent=23 // pred_fallthru
        _
      // Predicated region
      $region29: #{conv_lstm_cell.1} parent=23 // pred_check
        %p218 = pneg %p59
      $region30: #{conv_lstm_cell.1} parent=23 // pred_check_branch
        %220 = sbr.rel (%p218) target = $region32
      $region31: #{conv_lstm_cell.1} parent=23 // pred_region
        %p221 = scmp.lt.s32.totalorder %s13, 1
        %s222 = scalar_select %p221, %s13, 1
        %s223 = smul.addr %s222, 32
        %s224 = smul.addr %s223, 8
        %s225 = scalar_lea.vmem %s1, %s224
      $region32: #{conv_lstm_cell.1} parent=23 // pred_fallthru
        _
      // Predicated region
      $region33: #{conv_lstm_cell.1} parent=23 // pred_check
        %p226 = pneg %p85
      $region34: #{conv_lstm_cell.1} parent=23 // pred_check_branch
        %228 = sbr.rel (%p226) target = $region36
      $region35: #{conv_lstm_cell.1} parent=23 // pred_region
        %p229 = scmp.lt.s32.totalorder %s13, 1
        %s230 = scalar_select %p229, %s13, 1
        %s231 = smul.addr %s230, 2
        %s232 = smul.addr %s231, 8
        %s233 = scalar_lea.vmem %s2, %s232
      $region36: #{conv_lstm_cell.1} parent=23 // pred_fallthru
        _
    $region24: #{conv_lstm_cell.1} parent=5 // pred_fallthru
      _
    %p234 = scmp.le.s32.totalorder 1, %s13
    %p235 = scmp.lt.s32.totalorder %s13, 3
    %p236 = pnand %p234, %p235
    %p237 = pneg %p236
    // Predicated region
    $region37: #{conv_lstm_cell.1} parent=5 // pred_check
      _
    $region38: #{conv_lstm_cell.1} parent=5 // pred_check_branch
      %239 = sbr.rel (%p236) target = $region40
    $region39: #{conv_lstm_cell.1} parent=5 // pred_region
      %s240 = ssub.s32 %s13, 1
      %p241 = scmp.lt.s32.totalorder %s18, 1
      %s242 = scalar_select %p241, %s18, 1
      %s243 = smul.addr %s242, 32
      %s244 = smul.addr %s243, 8
      %s245 = scalar_lea.vmem %s0, %s244
      %p246 = pneg %p39
      %p247 = pneg %p36
      %p248 = scmp.lt.s32.totalorder %s18, 1
      %s249 = scalar_select %p248, %s18, 1
      %s250 = smul.addr %s249, 32
      %s251 = smul.addr %s250, 8
      %s252 = scalar_lea.vmem %s1, %s251
      %p253 = pneg %p65
      %p254 = pneg %p62
      %p255 = scmp.lt.s32.totalorder %s18, 1
      %s256 = scalar_select %p255, %s18, 1
      %s257 = smul.addr %s256, 2
      %s258 = smul.addr %s257, 8
      %s259 = scalar_lea.vmem %s2, %s258
      %p260 = pneg %p91
      %p261 = pneg %p88
      %p262 = pneg %p112
      %p263 = pneg %p109
      %p264 = pneg %p133
      %p265 = pneg %p130
      %p266 = pneg %p159
      %p267 = pneg %p156
      %p268 = scmp.lt.s32.totalorder %s18, 1
      %s269 = scalar_select %p268, %s18, 1
      %s270 = smul.addr %s269, 2
      %s271 = smul.addr %s270, 8
      %s272 = scalar_lea.vmem %s5, %s271
      %p273 = pneg %p185
      %p274 = pneg %p182
      %p275 = scmp.lt.s32.totalorder %s18, 1
      %s276 = scalar_select %p275, %s18, 1
      %s277 = smul.addr %s276, 2
      %s278 = smul.addr %s277, 8
      %s279 = scalar_lea.vmem %s6, %s278
      %p280 = scmp.lt.s32.totalorder %s18, 1
      %s281 = scalar_select %p280, %s18, 1
      %s282 = smul.addr %s281, 32
      %s283 = smul.addr %s282, 8
      %s284 = scalar_lea.vmem %s0, %s283
      %p285 = scmp.lt.s32.totalorder %s18, 1
      %s286 = scalar_select %p285, %s18, 1
      %s287 = smul.addr %s286, 32
      %s288 = smul.addr %s287, 8
      %s289 = scalar_lea.vmem %s1, %s288
      %p290 = scmp.lt.s32.totalorder %s18, 1
      %s291 = scalar_select %p290, %s18, 1
      %s292 = smul.addr %s291, 2
      %s293 = smul.addr %s292, 8
      %s294 = scalar_lea.vmem %s2, %s293
      %p295 = scmp.lt.s32.totalorder %s18, 1
      %s296 = scalar_select %p295, %s18, 1
      %s297 = smul.addr %s296, 2
      %s298 = smul.addr %s297, 8
      %s299 = scalar_lea.vmem %s5, %s298
      %p300 = scmp.lt.s32.totalorder %s18, 1
      %s301 = scalar_select %p300, %s18, 1
      %s302 = smul.addr %s301, 2
      %s303 = smul.addr %s302, 8
      %s304 = scalar_lea.vmem %s6, %s303
      %vm305 = vcmask 97280
      %306 = vst.msk [vmem:[#allocation2] sm:$0xff] %vm305, 0.0
      %307 = vst.msk [vmem:[#allocation2 + $0x8] sm:$0xff] %vm305, 0.0
      %vm308 = vcmask 91136
      %309 = vst.msk [vmem:[#allocation2 + $0x10] sm:$0x3] %vm308, 0.0
      %310 = vst.msk [vmem:[#allocation2 + $0x18] sm:$0xff] %vm305, 0.0
      %311 = vst.msk [vmem:[#allocation2 + $0x20] sm:$0xff] %vm305, 0.0
      %312 = vst.msk [vmem:[#allocation2 + $0x28] sm:$0x3] %vm308, 0.0
      %313 = vst.msk [vmem:[#allocation2 + $0x30] sm:$0xff] %vm305, 0.0
      %314 = vst.msk [vmem:[#allocation2 + $0x38] sm:$0xff] %vm305, 0.0
      %315 = vst.msk [vmem:[#allocation2 + $0x40] sm:$0x3] %vm308, 0.0
      %316 = vst.msk [vmem:[#allocation2 + $0x48] sm:$0xff] %vm305, 0.0
      %317 = vst.msk [vmem:[#allocation2 + $0x50] sm:$0xff] %vm305, 0.0
      %318 = vst.msk [vmem:[#allocation2 + $0x58] sm:$0x3] %vm308, 0.0
      %319 = vst.msk [vmem:[#allocation2 + $0x60] sm:$0xff] %vm305, 0.0
      %320 = vst.msk [vmem:[#allocation2 + $0x68] sm:$0xff] %vm305, 0.0
      %321 = vst.msk [vmem:[#allocation2 + $0x70] sm:$0x3] %vm308, 0.0
      %322 = vst.msk [vmem:[#allocation2 + $0x78] sm:$0xff] %vm305, 0.0
      %323 = vst.msk [vmem:[#allocation2 + $0x80] sm:$0xff] %vm305, 0.0
      %324 = vst.msk [vmem:[#allocation2 + $0x88] sm:$0x3] %vm308, 0.0
      %325 = vst.msk [vmem:[#allocation2 + $0x90] sm:$0xff] %vm305, 0.0
      %326 = vst.msk [vmem:[#allocation2 + $0x98] sm:$0xff] %vm305, 0.0
      %327 = vst.msk [vmem:[#allocation2 + $0xa0] sm:$0x3] %vm308, 0.0
      %328 = vst.msk [vmem:[#allocation2 + $0xa8] sm:$0xff] %vm305, 0.0
      %329 = vst.msk [vmem:[#allocation2 + $0xb0] sm:$0xff] %vm305, 0.0
      %330 = vst.msk [vmem:[#allocation2 + $0xb8] sm:$0x3] %vm308, 0.0
      %331 = vst.msk [vmem:[#allocation2 + $0xc0] sm:$0xff] %vm305, 0.0
      %332 = vst.msk [vmem:[#allocation2 + $0xc8] sm:$0xff] %vm305, 0.0
      %333 = vst.msk [vmem:[#allocation2 + $0xd0] sm:$0x3] %vm308, 0.0
      %334 = vst.msk [vmem:[#allocation2 + $0xd8] sm:$0xff] %vm305, 0.0
      %335 = vst.msk [vmem:[#allocation2 + $0xe0] sm:$0xff] %vm305, 0.0
      %336 = vst.msk [vmem:[#allocation2 + $0xe8] sm:$0x3] %vm308, 0.0
      %337 = vst.msk [vmem:[#allocation2 + $0xf0] sm:$0xff] %vm305, 0.0
      %338 = vst.msk [vmem:[#allocation2 + $0xf8] sm:$0xff] %vm305, 0.0
      %339 = vst.msk [vmem:[#allocation2 + $0x100] sm:$0x3] %vm308, 0.0
      %340 = vst.msk [vmem:[#allocation2 + $0x108] sm:$0xff] %vm305, 0.0
      %341 = vst.msk [vmem:[#allocation2 + $0x110] sm:$0xff] %vm305, 0.0
      %342 = vst.msk [vmem:[#allocation2 + $0x118] sm:$0x3] %vm308, 0.0
      %343 = vst.msk [vmem:[#allocation2 + $0x120] sm:$0xff] %vm305, 0.0
      %344 = vst.msk [vmem:[#allocation2 + $0x128] sm:$0xff] %vm305, 0.0
      %345 = vst.msk [vmem:[#allocation2 + $0x130] sm:$0x3] %vm308, 0.0
      %346 = vst.msk [vmem:[#allocation2 + $0x138] sm:$0xff] %vm305, 0.0
      %347 = vst.msk [vmem:[#allocation2 + $0x140] sm:$0xff] %vm305, 0.0
      %348 = vst.msk [vmem:[#allocation2 + $0x148] sm:$0x3] %vm308, 0.0
      %349 = vst.msk [vmem:[#allocation2 + $0x150] sm:$0xff] %vm305, 0.0
      %350 = vst.msk [vmem:[#allocation2 + $0x158] sm:$0xff] %vm305, 0.0
      %351 = vst.msk [vmem:[#allocation2 + $0x160] sm:$0x3] %vm308, 0.0
      %352 = vst.msk [vmem:[#allocation2 + $0x168] sm:$0xff] %vm305, 0.0
      %353 = vst.msk [vmem:[#allocation2 + $0x170] sm:$0xff] %vm305, 0.0
      %354 = vst.msk [vmem:[#allocation2 + $0x178] sm:$0x3] %vm308, 0.0
      %355 = vst.msk [vmem:[#allocation2 + $0x180] sm:$0xff] %vm305, 0.0
      %356 = vst.msk [vmem:[#allocation2 + $0x188] sm:$0xff] %vm305, 0.0
      %357 = vst.msk [vmem:[#allocation2 + $0x190] sm:$0x3] %vm308, 0.0
      %358 = vst.msk [vmem:[#allocation2 + $0x198] sm:$0xff] %vm305, 0.0
      %359 = vst.msk [vmem:[#allocation2 + $0x1a0] sm:$0xff] %vm305, 0.0
      %360 = vst.msk [vmem:[#allocation2 + $0x1a8] sm:$0x3] %vm308, 0.0
      %v361 = vld [vmem:[%s284] sm:$0xff]
      %v362 = vld [vmem:[%s284 + $0x8] sm:$0xff]
      %v363 = vld [vmem:[%s284 + $0x10] sm:$0xff]
      %v364 = vld [vmem:[%s284 + $0x18] sm:$0xff]
      %v365 = vld [vmem:[%s284 + $0x20] sm:$0xff]
      %v366 = vld [vmem:[%s284 + $0x28] sm:$0xff]
      %v367 = vld [vmem:[%s284 + $0x30] sm:$0xff]
      %v368 = vld [vmem:[%s284 + $0x38] sm:$0xff]
      %v369 = vld [vmem:[%s284 + $0x40] sm:$0xff]
      %v370 = vld [vmem:[%s284 + $0x48] sm:$0xff]
      %v371 = vld [vmem:[%s284 + $0x50] sm:$0xff]
      %v372 = vld [vmem:[%s284 + $0x58] sm:$0xff]
      %v373 = vld [vmem:[%s284 + $0x60] sm:$0xff]
      %v374 = vld [vmem:[%s284 + $0x68] sm:$0xff]
      %v375 = vld [vmem:[%s284 + $0x70] sm:$0xff]
      %v376 = vld [vmem:[%s284 + $0x78] sm:$0xff]
      %v377 = vld [vmem:[%s284 + $0x80] sm:$0xff]
      %v378 = vld [vmem:[%s284 + $0x88] sm:$0xff]
      %v379 = vld [vmem:[%s284 + $0x90] sm:$0xff]
      %v380 = vld [vmem:[%s284 + $0x98] sm:$0xff]
      %v381 = vld [vmem:[%s284 + $0xa0] sm:$0xff]
      %v382 = vld [vmem:[%s284 + $0xa8] sm:$0xff]
      %v383 = vld [vmem:[%s284 + $0xb0] sm:$0xff]
      %v384 = vld [vmem:[%s284 + $0xb8] sm:$0xff]
      %v385 = vld [vmem:[%s284 + $0xc0] sm:$0xff]
      %v386 = vld [vmem:[%s284 + $0xc8] sm:$0xff]
      %v387 = vld [vmem:[%s284 + $0xd0] sm:$0xff]
      %v388 = vld [vmem:[%s284 + $0xd8] sm:$0xff]
      %v389 = vld [vmem:[%s284 + $0xe0] sm:$0xff]
      %v390 = vld [vmem:[%s284 + $0xe8] sm:$0xff]
      %v391 = vld [vmem:[%s284 + $0xf0] sm:$0xff]
      %v392 = vld [vmem:[%s284 + $0xf8] sm:$0xff]
      %v393 = vld [vmem:[%s289] sm:$0xff]
      %v394 = vld [vmem:[%s289 + $0x8] sm:$0xff]
      %v395 = vld [vmem:[%s289 + $0x10] sm:$0xff]
      %v396 = vld [vmem:[%s289 + $0x18] sm:$0xff]
      %v397 = vld [vmem:[%s289 + $0x20] sm:$0xff]
      %v398 = vld [vmem:[%s289 + $0x28] sm:$0xff]
      %v399 = vld [vmem:[%s289 + $0x30] sm:$0xff]
      %v400 = vld [vmem:[%s289 + $0x38] sm:$0xff]
      %v401 = vld [vmem:[%s289 + $0x40] sm:$0xff]
      %v402 = vld [vmem:[%s289 + $0x48] sm:$0xff]
      %v403 = vld [vmem:[%s289 + $0x50] sm:$0xff]
      %v404 = vld [vmem:[%s289 + $0x58] sm:$0xff]
      %v405 = vld [vmem:[%s289 + $0x60] sm:$0xff]
      %v406 = vld [vmem:[%s289 + $0x68] sm:$0xff]
      %v407 = vld [vmem:[%s289 + $0x70] sm:$0xff]
      %v408 = vld [vmem:[%s289 + $0x78] sm:$0xff]
      %v409 = vld [vmem:[%s289 + $0x80] sm:$0xff]
      %v410 = vld [vmem:[%s289 + $0x88] sm:$0xff]
      %v411 = vld [vmem:[%s289 + $0x90] sm:$0xff]
      %v412 = vld [vmem:[%s289 + $0x98] sm:$0xff]
      %v413 = vld [vmem:[%s289 + $0xa0] sm:$0xff]
      %v414 = vld [vmem:[%s289 + $0xa8] sm:$0xff]
      %v415 = vld [vmem:[%s289 + $0xb0] sm:$0xff]
      %v416 = vld [vmem:[%s289 + $0xb8] sm:$0xff]
      %v417 = vld [vmem:[%s289 + $0xc0] sm:$0xff]
      %v418 = vld [vmem:[%s289 + $0xc8] sm:$0xff]
      %v419 = vld [vmem:[%s289 + $0xd0] sm:$0xff]
      %v420 = vld [vmem:[%s289 + $0xd8] sm:$0xff]
      %v421 = vld [vmem:[%s289 + $0xe0] sm:$0xff]
      %v422 = vld [vmem:[%s289 + $0xe8] sm:$0xff]
      %v423 = vld [vmem:[%s289 + $0xf0] sm:$0xff]
      %v424 = vld [vmem:[%s289 + $0xf8] sm:$0xff]
      %457 = vrot.lane.b32.xlu0 %v393, 4
      %v458 = vpop.permute.xlu0 %457
      %459 = vrot.lane.b32.xlu0 %v394, 4
      %v460 = vpop.permute.xlu0 %459
      %461 = vrot.lane.b32.xlu0 %v395, 4
      %v462 = vpop.permute.xlu0 %461
      %463 = vrot.lane.b32.xlu0 %v396, 4
      %v464 = vpop.permute.xlu0 %463
      %465 = vrot.lane.b32.xlu0 %v397, 4
      %v466 = vpop.permute.xlu0 %465
      %467 = vrot.lane.b32.xlu0 %v398, 4
      %v468 = vpop.permute.xlu0 %467
      %469 = vrot.lane.b32.xlu0 %v399, 4
      %v470 = vpop.permute.xlu0 %469
      %471 = vrot.lane.b32.xlu0 %v400, 4
      %v472 = vpop.permute.xlu0 %471
      %473 = vrot.lane.b32.xlu0 %v401, 4
      %v474 = vpop.permute.xlu0 %473
      %475 = vrot.lane.b32.xlu0 %v402, 4
      %v476 = vpop.permute.xlu0 %475
      %477 = vrot.lane.b32.xlu0 %v403, 4
      %v478 = vpop.permute.xlu0 %477
      %479 = vrot.lane.b32.xlu0 %v404, 4
      %v480 = vpop.permute.xlu0 %479
      %481 = vrot.lane.b32.xlu0 %v405, 4
      %v482 = vpop.permute.xlu0 %481
      %483 = vrot.lane.b32.xlu0 %v406, 4
      %v484 = vpop.permute.xlu0 %483
      %485 = vrot.lane.b32.xlu0 %v407, 4
      %v486 = vpop.permute.xlu0 %485
      %487 = vrot.lane.b32.xlu0 %v408, 4
      %v488 = vpop.permute.xlu0 %487
      %489 = vrot.lane.b32.xlu0 %v409, 4
      %v490 = vpop.permute.xlu0 %489
      %491 = vrot.lane.b32.xlu0 %v410, 4
      %v492 = vpop.permute.xlu0 %491
      %493 = vrot.lane.b32.xlu0 %v411, 4
      %v494 = vpop.permute.xlu0 %493
      %495 = vrot.lane.b32.xlu0 %v412, 4
      %v496 = vpop.permute.xlu0 %495
      %497 = vrot.lane.b32.xlu0 %v413, 4
      %v498 = vpop.permute.xlu0 %497
      %499 = vrot.lane.b32.xlu0 %v414, 4
      %v500 = vpop.permute.xlu0 %499
      %501 = vrot.lane.b32.xlu0 %v415, 4
      %v502 = vpop.permute.xlu0 %501
      %503 = vrot.lane.b32.xlu0 %v416, 4
      %v504 = vpop.permute.xlu0 %503
      %505 = vrot.lane.b32.xlu0 %v417, 4
      %v506 = vpop.permute.xlu0 %505
      %507 = vrot.lane.b32.xlu0 %v418, 4
      %v508 = vpop.permute.xlu0 %507
      %509 = vrot.lane.b32.xlu0 %v419, 4
      %v510 = vpop.permute.xlu0 %509
      %511 = vrot.lane.b32.xlu0 %v420, 4
      %v512 = vpop.permute.xlu0 %511
      %513 = vrot.lane.b32.xlu0 %v421, 4
      %v514 = vpop.permute.xlu0 %513
      %515 = vrot.lane.b32.xlu0 %v422, 4
      %v516 = vpop.permute.xlu0 %515
      %517 = vrot.lane.b32.xlu0 %v423, 4
      %v518 = vpop.permute.xlu0 %517
      %519 = vrot.lane.b32.xlu0 %v424, 4
      %v520 = vpop.permute.xlu0 %519
      %vm553 = vcmask 31744
      %v554 = vsel %vm553, %v361, %v458
      %v555 = vsel %vm553, %v362, %v460
      %v556 = vsel %vm553, %v363, %v462
      %v557 = vsel %vm553, %v364, %v464
      %v558 = vsel %vm553, %v365, %v466
      %v559 = vsel %vm553, %v366, %v468
      %v560 = vsel %vm553, %v367, %v470
      %v561 = vsel %vm553, %v368, %v472
      %v562 = vsel %vm553, %v369, %v474
      %v563 = vsel %vm553, %v370, %v476
      %v564 = vsel %vm553, %v371, %v478
      %v565 = vsel %vm553, %v372, %v480
      %v566 = vsel %vm553, %v373, %v482
      %v567 = vsel %vm553, %v374, %v484
      %v568 = vsel %vm553, %v375, %v486
      %v569 = vsel %vm553, %v376, %v488
      %v570 = vsel %vm553, %v377, %v490
      %v571 = vsel %vm553, %v378, %v492
      %v572 = vsel %vm553, %v379, %v494
      %v573 = vsel %vm553, %v380, %v496
      %v574 = vsel %vm553, %v381, %v498
      %v575 = vsel %vm553, %v382, %v500
      %v576 = vsel %vm553, %v383, %v502
      %v577 = vsel %vm553, %v384, %v504
      %v578 = vsel %vm553, %v385, %v506
      %v579 = vsel %vm553, %v386, %v508
      %v580 = vsel %vm553, %v387, %v510
      %v581 = vsel %vm553, %v388, %v512
      %v582 = vsel %vm553, %v389, %v514
      %v583 = vsel %vm553, %v390, %v516
      %v584 = vsel %vm553, %v391, %v518
      %v585 = vsel %vm553, %v392, %v520
      %s586 = scalar_lea.vmem [#allocation2], 24
      %587 = vst.msk [vmem:[%s586 + $0x1] sm:$0xff] %vm305, %v554
      %588 = vst.msk [vmem:[%s586 + $0x9] sm:$0xff] %vm305, %v555
      %589 = vst.msk [vmem:[%s586 + $0x19] sm:$0xff] %vm305, %v556
      %590 = vst.msk [vmem:[%s586 + $0x21] sm:$0xff] %vm305, %v557
      %591 = vst.msk [vmem:[%s586 + $0x31] sm:$0xff] %vm305, %v558
      %592 = vst.msk [vmem:[%s586 + $0x39] sm:$0xff] %vm305, %v559
      %593 = vst.msk [vmem:[%s586 + $0x49] sm:$0xff] %vm305, %v560
      %594 = vst.msk [vmem:[%s586 + $0x51] sm:$0xff] %vm305, %v561
      %595 = vst.msk [vmem:[%s586 + $0x61] sm:$0xff] %vm305, %v562
      %596 = vst.msk [vmem:[%s586 + $0x69] sm:$0xff] %vm305, %v563
      %597 = vst.msk [vmem:[%s586 + $0x79] sm:$0xff] %vm305, %v564
      %598 = vst.msk [vmem:[%s586 + $0x81] sm:$0xff] %vm305, %v565
      %599 = vst.msk [vmem:[%s586 + $0x91] sm:$0xff] %vm305, %v566
      %600 = vst.msk [vmem:[%s586 + $0x99] sm:$0xff] %vm305, %v567
      %601 = vst.msk [vmem:[%s586 + $0xa9] sm:$0xff] %vm305, %v568
      %602 = vst.msk [vmem:[%s586 + $0xb1] sm:$0xff] %vm305, %v569
      %603 = vst.msk [vmem:[%s586 + $0xc1] sm:$0xff] %vm305, %v570
      %604 = vst.msk [vmem:[%s586 + $0xc9] sm:$0xff] %vm305, %v571
      %605 = vst.msk [vmem:[%s586 + $0xd9] sm:$0xff] %vm305, %v572
      %606 = vst.msk [vmem:[%s586 + $0xe1] sm:$0xff] %vm305, %v573
      %607 = vst.msk [vmem:[%s586 + $0xf1] sm:$0xff] %vm305, %v574
      %608 = vst.msk [vmem:[%s586 + $0xf9] sm:$0xff] %vm305, %v575
      %609 = vst.msk [vmem:[%s586 + $0x109] sm:$0xff] %vm305, %v576
      %610 = vst.msk [vmem:[%s586 + $0x111] sm:$0xff] %vm305, %v577
      %611 = vst.msk [vmem:[%s586 + $0x121] sm:$0xff] %vm305, %v578
      %612 = vst.msk [vmem:[%s586 + $0x129] sm:$0xff] %vm305, %v579
      %613 = vst.msk [vmem:[%s586 + $0x139] sm:$0xff] %vm305, %v580
      %614 = vst.msk [vmem:[%s586 + $0x141] sm:$0xff] %vm305, %v581
      %615 = vst.msk [vmem:[%s586 + $0x151] sm:$0xff] %vm305, %v582
      %616 = vst.msk [vmem:[%s586 + $0x159] sm:$0xff] %vm305, %v583
      %617 = vst.msk [vmem:[%s586 + $0x169] sm:$0xff] %vm305, %v584
      %618 = vst.msk [vmem:[%s586 + $0x171] sm:$0xff] %vm305, %v585
      %v619 = vld [vmem:[#allocation2] sm:$0xff]
      %v620 = vld [vmem:[#allocation2 + $0x8] sm:$0xff]
      %v621 = vld [vmem:[#allocation2 + $0x10] sm:$0x3]
      %v622 = vld [vmem:[#allocation2 + $0x18] sm:$0xff]
      %v623 = vld [vmem:[#allocation2 + $0x20] sm:$0xff]
      %v624 = vld [vmem:[#allocation2 + $0x28] sm:$0x3]
      %v625 = vld [vmem:[#allocation2 + $0x30] sm:$0xff]
      %v626 = vld [vmem:[#allocation2 + $0x38] sm:$0xff]
      %v627 = vld [vmem:[#allocation2 + $0x40] sm:$0x3]
      %v628 = vld [vmem:[#allocation2 + $0x48] sm:$0xff]
      %v629 = vld [vmem:[#allocation2 + $0x50] sm:$0xff]
      %v630 = vld [vmem:[#allocation2 + $0x58] sm:$0x3]
      %v631 = vld [vmem:[#allocation2 + $0x60] sm:$0xff]
      %v632 = vld [vmem:[#allocation2 + $0x68] sm:$0xff]
      %v633 = vld [vmem:[#allocation2 + $0x70] sm:$0x3]
      %v634 = vld [vmem:[#allocation2 + $0x78] sm:$0xff]
      %v635 = vld [vmem:[#allocation2 + $0x80] sm:$0xff]
      %v636 = vld [vmem:[#allocation2 + $0x88] sm:$0x3]
      %v637 = vld [vmem:[#allocation2 + $0x90] sm:$0xff]
      %v638 = vld [vmem:[#allocation2 + $0x98] sm:$0xff]
      %v639 = vld [vmem:[#allocation2 + $0xa0] sm:$0x3]
      %v640 = vld [vmem:[#allocation2 + $0xa8] sm:$0xff]
      %v641 = vld [vmem:[#allocation2 + $0xb0] sm:$0xff]
      %v642 = vld [vmem:[#allocation2 + $0xb8] sm:$0x3]
      %v643 = vld [vmem:[#allocation2 + $0xc0] sm:$0xff]
      %v644 = vld [vmem:[#allocation2 + $0xc8] sm:$0xff]
      %v645 = vld [vmem:[#allocation2 + $0xd0] sm:$0x3]
      %v646 = vld [vmem:[#allocation2 + $0xd8] sm:$0xff]
      %v647 = vld [vmem:[#allocation2 + $0xe0] sm:$0xff]
      %v648 = vld [vmem:[#allocation2 + $0xe8] sm:$0x3]
      %v649 = vld [vmem:[#allocation2 + $0xf0] sm:$0xff]
      %v650 = vld [vmem:[#allocation2 + $0xf8] sm:$0xff]
      %v651 = vld [vmem:[#allocation2 + $0x100] sm:$0x3]
      %v652 = vld [vmem:[#allocation2 + $0x108] sm:$0xff]
      %v653 = vld [vmem:[#allocation2 + $0x110] sm:$0xff]
      %v654 = vld [vmem:[#allocation2 + $0x118] sm:$0x3]
      %v655 = vld [vmem:[#allocation2 + $0x120] sm:$0xff]
      %v656 = vld [vmem:[#allocation2 + $0x128] sm:$0xff]
      %v657 = vld [vmem:[#allocation2 + $0x130] sm:$0x3]
      %v658 = vld [vmem:[#allocation2 + $0x138] sm:$0xff]
      %v659 = vld [vmem:[#allocation2 + $0x140] sm:$0xff]
      %v660 = vld [vmem:[#allocation2 + $0x148] sm:$0x3]
      %v661 = vld [vmem:[#allocation2 + $0x150] sm:$0xff]
      %v662 = vld [vmem:[#allocation2 + $0x158] sm:$0xff]
      %v663 = vld [vmem:[#allocation2 + $0x160] sm:$0x3]
      %v664 = vld [vmem:[#allocation2 + $0x168] sm:$0xff]
      %v665 = vld [vmem:[#allocation2 + $0x170] sm:$0xff]
      %v666 = vld [vmem:[#allocation2 + $0x178] sm:$0x3]
      %v667 = vld [vmem:[#allocation2 + $0x180] sm:$0xff]
      %v668 = vld [vmem:[#allocation2 + $0x188] sm:$0xff]
      %v669 = vld [vmem:[#allocation2 + $0x190] sm:$0x3]
      %v670 = vld [vmem:[#allocation2 + $0x198] sm:$0xff]
      %v671 = vld [vmem:[#allocation2 + $0x1a0] sm:$0xff]
      %v672 = vld [vmem:[#allocation2 + $0x1a8] sm:$0x3]
      %vm721 = vcmask 1046528
      %v722 = vrot.slane %v619, 1
      %v723 = vrot.slane %v620, 1
      %v724 = vsel %vm721, %v722, %v723
      %v725 = vrot.slane %v621, 1
      %v726 = vsel %vm721, %v723, %v725
      %v727 = vrot.slane %v622, 1
      %v728 = vrot.slane %v623, 1
      %v729 = vsel %vm721, %v727, %v728
      %v730 = vrot.slane %v624, 1
      %v731 = vsel %vm721, %v728, %v730
      %v732 = vrot.slane %v625, 1
      %v733 = vrot.slane %v626, 1
      %v734 = vsel %vm721, %v732, %v733
      %v735 = vrot.slane %v627, 1
      %v736 = vsel %vm721, %v733, %v735
      %v737 = vrot.slane %v628, 1
      %v738 = vrot.slane %v629, 1
      %v739 = vsel %vm721, %v737, %v738
      %v740 = vrot.slane %v630, 1
      %v741 = vsel %vm721, %v738, %v740
      %v742 = vrot.slane %v631, 1
      %v743 = vrot.slane %v632, 1
      %v744 = vsel %vm721, %v742, %v743
      %v745 = vrot.slane %v633, 1
      %v746 = vsel %vm721, %v743, %v745
      %v747 = vrot.slane %v634, 1
      %v748 = vrot.slane %v635, 1
      %v749 = vsel %vm721, %v747, %v748
      %v750 = vrot.slane %v636, 1
      %v751 = vsel %vm721, %v748, %v750
      %v752 = vrot.slane %v637, 1
      %v753 = vrot.slane %v638, 1
      %v754 = vsel %vm721, %v752, %v753
      %v755 = vrot.slane %v639, 1
      %v756 = vsel %vm721, %v753, %v755
      %v757 = vrot.slane %v640, 1
      %v758 = vrot.slane %v641, 1
      %v759 = vsel %vm721, %v757, %v758
      %v760 = vrot.slane %v642, 1
      %v761 = vsel %vm721, %v758, %v760
      %v762 = vrot.slane %v643, 1
      %v763 = vrot.slane %v644, 1
      %v764 = vsel %vm721, %v762, %v763
      %v765 = vrot.slane %v645, 1
      %v766 = vsel %vm721, %v763, %v765
      %v767 = vrot.slane %v646, 1
      %v768 = vrot.slane %v647, 1
      %v769 = vsel %vm721, %v767, %v768
      %v770 = vrot.slane %v648, 1
      %v771 = vsel %vm721, %v768, %v770
      %v772 = vrot.slane %v649, 1
      %v773 = vrot.slane %v650, 1
      %v774 = vsel %vm721, %v772, %v773
      %v775 = vrot.slane %v651, 1
      %v776 = vsel %vm721, %v773, %v775
      %v777 = vrot.slane %v652, 1
      %v778 = vrot.slane %v653, 1
      %v779 = vsel %vm721, %v777, %v778
      %v780 = vrot.slane %v654, 1
      %v781 = vsel %vm721, %v778, %v780
      %v782 = vrot.slane %v655, 1
      %v783 = vrot.slane %v656, 1
      %v784 = vsel %vm721, %v782, %v783
      %v785 = vrot.slane %v657, 1
      %v786 = vsel %vm721, %v783, %v785
      %v787 = vrot.slane %v658, 1
      %v788 = vrot.slane %v659, 1
      %v789 = vsel %vm721, %v787, %v788
      %v790 = vrot.slane %v660, 1
      %v791 = vsel %vm721, %v788, %v790
      %v792 = vrot.slane %v661, 1
      %v793 = vrot.slane %v662, 1
      %v794 = vsel %vm721, %v792, %v793
      %v795 = vrot.slane %v663, 1
      %v796 = vsel %vm721, %v793, %v795
      %v797 = vrot.slane %v664, 1
      %v798 = vrot.slane %v665, 1
      %v799 = vsel %vm721, %v797, %v798
      %v800 = vrot.slane %v666, 1
      %v801 = vsel %vm721, %v798, %v800
      %vm802 = vcmask 1045504
      %v803 = vrot.slane %v619, 2
      %v804 = vrot.slane %v620, 2
      %v805 = vsel %vm802, %v803, %v804
      %v806 = vrot.slane %v621, 2
      %v807 = vsel %vm802, %v804, %v806
      %v808 = vrot.slane %v622, 2
      %v809 = vrot.slane %v623, 2
      %v810 = vsel %vm802, %v808, %v809
      %v811 = vrot.slane %v624, 2
      %v812 = vsel %vm802, %v809, %v811
      %v813 = vrot.slane %v625, 2
      %v814 = vrot.slane %v626, 2
      %v815 = vsel %vm802, %v813, %v814
      %v816 = vrot.slane %v627, 2
      %v817 = vsel %vm802, %v814, %v816
      %v818 = vrot.slane %v628, 2
      %v819 = vrot.slane %v629, 2
      %v820 = vsel %vm802, %v818, %v819
      %v821 = vrot.slane %v630, 2
      %v822 = vsel %vm802, %v819, %v821
      %v823 = vrot.slane %v631, 2
      %v824 = vrot.slane %v632, 2
      %v825 = vsel %vm802, %v823, %v824
      %v826 = vrot.slane %v633, 2
      %v827 = vsel %vm802, %v824, %v826
      %v828 = vrot.slane %v634, 2
      %v829 = vrot.slane %v635, 2
      %v830 = vsel %vm802, %v828, %v829
      %v831 = vrot.slane %v636, 2
      %v832 = vsel %vm802, %v829, %v831
      %v833 = vrot.slane %v637, 2
      %v834 = vrot.slane %v638, 2
      %v835 = vsel %vm802, %v833, %v834
      %v836 = vrot.slane %v639, 2
      %v837 = vsel %vm802, %v834, %v836
      %v838 = vrot.slane %v640, 2
      %v839 = vrot.slane %v641, 2
      %v840 = vsel %vm802, %v838, %v839
      %v841 = vrot.slane %v642, 2
      %v842 = vsel %vm802, %v839, %v841
      %v843 = vrot.slane %v643, 2
      %v844 = vrot.slane %v644, 2
      %v845 = vsel %vm802, %v843, %v844
      %v846 = vrot.slane %v645, 2
      %v847 = vsel %vm802, %v844, %v846
      %v848 = vrot.slane %v646, 2
      %v849 = vrot.slane %v647, 2
      %v850 = vsel %vm802, %v848, %v849
      %v851 = vrot.slane %v648, 2
      %v852 = vsel %vm802, %v849, %v851
      %v853 = vrot.slane %v649, 2
      %v854 = vrot.slane %v650, 2
      %v855 = vsel %vm802, %v853, %v854
      %v856 = vrot.slane %v651, 2
      %v857 = vsel %vm802, %v854, %v856
      %v858 = vrot.slane %v652, 2
      %v859 = vrot.slane %v653, 2
      %v860 = vsel %vm802, %v858, %v859
      %v861 = vrot.slane %v654, 2
      %v862 = vsel %vm802, %v859, %v861
      %v863 = vrot.slane %v655, 2
      %v864 = vrot.slane %v656, 2
      %v865 = vsel %vm802, %v863, %v864
      %v866 = vrot.slane %v657, 2
      %v867 = vsel %vm802, %v864, %v866
      %v868 = vrot.slane %v658, 2
      %v869 = vrot.slane %v659, 2
      %v870 = vsel %vm802, %v868, %v869
      %v871 = vrot.slane %v660, 2
      %v872 = vsel %vm802, %v869, %v871
      %v873 = vrot.slane %v661, 2
      %v874 = vrot.slane %v662, 2
      %v875 = vsel %vm802, %v873, %v874
      %v876 = vrot.slane %v663, 2
      %v877 = vsel %vm802, %v874, %v876
      %v878 = vrot.slane %v664, 2
      %v879 = vrot.slane %v665, 2
      %v880 = vsel %vm802, %v878, %v879
      %v881 = vrot.slane %v666, 2
      %v882 = vsel %vm802, %v879, %v881
      %v886 = vrot.slane %v667, 1
      %v887 = vrot.slane %v668, 1
      %v888 = vsel %vm721, %v886, %v887
      %v889 = vrot.slane %v669, 1
      %v890 = vsel %vm721, %v887, %v889
      %v891 = vrot.slane %v667, 2
      %v892 = vrot.slane %v668, 2
      %v893 = vsel %vm802, %v891, %v892
      %v894 = vrot.slane %v669, 2
      %v895 = vsel %vm802, %v892, %v894
      %v899 = vrot.slane %v670, 1
      %v900 = vrot.slane %v671, 1
      %v901 = vsel %vm721, %v899, %v900
      %v902 = vrot.slane %v672, 1
      %v903 = vsel %vm721, %v900, %v902
      %v904 = vrot.slane %v670, 2
      %v905 = vrot.slane %v671, 2
      %v906 = vsel %vm802, %v904, %v905
      %v907 = vrot.slane %v672, 2
      %v908 = vsel %vm802, %v905, %v907
      %909 = vrot.lane.b32.xlu0 %v724, 12
      %v910 = vpop.permute.xlu0 %909
      %911 = vrot.lane.b32.xlu0 %v726, 12
      %v912 = vpop.permute.xlu0 %911
      %913 = vrot.lane.b32.xlu0 %v729, 12
      %v914 = vpop.permute.xlu0 %913
      %915 = vrot.lane.b32.xlu0 %v731, 12
      %v916 = vpop.permute.xlu0 %915
      %917 = vrot.lane.b32.xlu0 %v734, 12
      %v918 = vpop.permute.xlu0 %917
      %919 = vrot.lane.b32.xlu0 %v736, 12
      %v920 = vpop.permute.xlu0 %919
      %921 = vrot.lane.b32.xlu0 %v739, 12
      %v922 = vpop.permute.xlu0 %921
      %923 = vrot.lane.b32.xlu0 %v741, 12
      %v924 = vpop.permute.xlu0 %923
      %925 = vrot.lane.b32.xlu0 %v744, 12
      %v926 = vpop.permute.xlu0 %925
      %927 = vrot.lane.b32.xlu0 %v746, 12
      %v928 = vpop.permute.xlu0 %927
      %929 = vrot.lane.b32.xlu0 %v749, 12
      %v930 = vpop.permute.xlu0 %929
      %931 = vrot.lane.b32.xlu0 %v751, 12
      %v932 = vpop.permute.xlu0 %931
      %933 = vrot.lane.b32.xlu0 %v754, 12
      %v934 = vpop.permute.xlu0 %933
      %935 = vrot.lane.b32.xlu0 %v756, 12
      %v936 = vpop.permute.xlu0 %935
      %937 = vrot.lane.b32.xlu0 %v759, 12
      %v938 = vpop.permute.xlu0 %937
      %939 = vrot.lane.b32.xlu0 %v761, 12
      %v940 = vpop.permute.xlu0 %939
      %941 = vrot.lane.b32.xlu0 %v764, 12
      %v942 = vpop.permute.xlu0 %941
      %943 = vrot.lane.b32.xlu0 %v766, 12
      %v944 = vpop.permute.xlu0 %943
      %945 = vrot.lane.b32.xlu0 %v769, 12
      %v946 = vpop.permute.xlu0 %945
      %947 = vrot.lane.b32.xlu0 %v771, 12
      %v948 = vpop.permute.xlu0 %947
      %949 = vrot.lane.b32.xlu0 %v774, 12
      %v950 = vpop.permute.xlu0 %949
      %951 = vrot.lane.b32.xlu0 %v776, 12
      %v952 = vpop.permute.xlu0 %951
      %953 = vrot.lane.b32.xlu0 %v779, 12
      %v954 = vpop.permute.xlu0 %953
      %955 = vrot.lane.b32.xlu0 %v781, 12
      %v956 = vpop.permute.xlu0 %955
      %957 = vrot.lane.b32.xlu0 %v784, 12
      %v958 = vpop.permute.xlu0 %957
      %959 = vrot.lane.b32.xlu0 %v786, 12
      %v960 = vpop.permute.xlu0 %959
      %961 = vrot.lane.b32.xlu0 %v789, 12
      %v962 = vpop.permute.xlu0 %961
      %963 = vrot.lane.b32.xlu0 %v791, 12
      %v964 = vpop.permute.xlu0 %963
      %965 = vrot.lane.b32.xlu0 %v794, 12
      %v966 = vpop.permute.xlu0 %965
      %967 = vrot.lane.b32.xlu0 %v796, 12
      %v968 = vpop.permute.xlu0 %967
      %969 = vrot.lane.b32.xlu0 %v799, 12
      %v970 = vpop.permute.xlu0 %969
      %971 = vrot.lane.b32.xlu0 %v801, 12
      %v972 = vpop.permute.xlu0 %971
      %1005 = vrot.lane.b32.xlu0 %v805, 24
      %v1006 = vpop.permute.xlu0 %1005
      %1007 = vrot.lane.b32.xlu0 %v807, 24
      %v1008 = vpop.permute.xlu0 %1007
      %1009 = vrot.lane.b32.xlu0 %v810, 24
      %v1010 = vpop.permute.xlu0 %1009
      %1011 = vrot.lane.b32.xlu0 %v812, 24
      %v1012 = vpop.permute.xlu0 %1011
      %1013 = vrot.lane.b32.xlu0 %v815, 24
      %v1014 = vpop.permute.xlu0 %1013
      %1015 = vrot.lane.b32.xlu0 %v817, 24
      %v1016 = vpop.permute.xlu0 %1015
      %1017 = vrot.lane.b32.xlu0 %v820, 24
      %v1018 = vpop.permute.xlu0 %1017
      %1019 = vrot.lane.b32.xlu0 %v822, 24
      %v1020 = vpop.permute.xlu0 %1019
      %1021 = vrot.lane.b32.xlu0 %v825, 24
      %v1022 = vpop.permute.xlu0 %1021
      %1023 = vrot.lane.b32.xlu0 %v827, 24
      %v1024 = vpop.permute.xlu0 %1023
      %1025 = vrot.lane.b32.xlu0 %v830, 24
      %v1026 = vpop.permute.xlu0 %1025
      %1027 = vrot.lane.b32.xlu0 %v832, 24
      %v1028 = vpop.permute.xlu0 %1027
      %1029 = vrot.lane.b32.xlu0 %v835, 24
      %v1030 = vpop.permute.xlu0 %1029
      %1031 = vrot.lane.b32.xlu0 %v837, 24
      %v1032 = vpop.permute.xlu0 %1031
      %1033 = vrot.lane.b32.xlu0 %v840, 24
      %v1034 = vpop.permute.xlu0 %1033
      %1035 = vrot.lane.b32.xlu0 %v842, 24
      %v1036 = vpop.permute.xlu0 %1035
      %1037 = vrot.lane.b32.xlu0 %v845, 24
      %v1038 = vpop.permute.xlu0 %1037
      %1039 = vrot.lane.b32.xlu0 %v847, 24
      %v1040 = vpop.permute.xlu0 %1039
      %1041 = vrot.lane.b32.xlu0 %v850, 24
      %v1042 = vpop.permute.xlu0 %1041
      %1043 = vrot.lane.b32.xlu0 %v852, 24
      %v1044 = vpop.permute.xlu0 %1043
      %1045 = vrot.lane.b32.xlu0 %v855, 24
      %v1046 = vpop.permute.xlu0 %1045
      %1047 = vrot.lane.b32.xlu0 %v857, 24
      %v1048 = vpop.permute.xlu0 %1047
      %1049 = vrot.lane.b32.xlu0 %v860, 24
      %v1050 = vpop.permute.xlu0 %1049
      %1051 = vrot.lane.b32.xlu0 %v862, 24
      %v1052 = vpop.permute.xlu0 %1051
      %1053 = vrot.lane.b32.xlu0 %v865, 24
      %v1054 = vpop.permute.xlu0 %1053
      %1055 = vrot.lane.b32.xlu0 %v867, 24
      %v1056 = vpop.permute.xlu0 %1055
      %1057 = vrot.lane.b32.xlu0 %v870, 24
      %v1058 = vpop.permute.xlu0 %1057
      %1059 = vrot.lane.b32.xlu0 %v872, 24
      %v1060 = vpop.permute.xlu0 %1059
      %1061 = vrot.lane.b32.xlu0 %v875, 24
      %v1062 = vpop.permute.xlu0 %1061
      %1063 = vrot.lane.b32.xlu0 %v877, 24
      %v1064 = vpop.permute.xlu0 %1063
      %1065 = vrot.lane.b32.xlu0 %v880, 24
      %v1066 = vpop.permute.xlu0 %1065
      %1067 = vrot.lane.b32.xlu0 %v882, 24
      %v1068 = vpop.permute.xlu0 %1067
      %1101 = vrot.lane.b32.xlu0 %v622, 36
      %v1102 = vpop.permute.xlu0 %1101
      %1103 = vrot.lane.b32.xlu0 %v623, 36
      %v1104 = vpop.permute.xlu0 %1103
      %1105 = vrot.lane.b32.xlu0 %v625, 36
      %v1106 = vpop.permute.xlu0 %1105
      %1107 = vrot.lane.b32.xlu0 %v626, 36
      %v1108 = vpop.permute.xlu0 %1107
      %1109 = vrot.lane.b32.xlu0 %v628, 36
      %v1110 = vpop.permute.xlu0 %1109
      %1111 = vrot.lane.b32.xlu0 %v629, 36
      %v1112 = vpop.permute.xlu0 %1111
      %1113 = vrot.lane.b32.xlu0 %v631, 36
      %v1114 = vpop.permute.xlu0 %1113
      %1115 = vrot.lane.b32.xlu0 %v632, 36
      %v1116 = vpop.permute.xlu0 %1115
      %1117 = vrot.lane.b32.xlu0 %v634, 36
      %v1118 = vpop.permute.xlu0 %1117
      %1119 = vrot.lane.b32.xlu0 %v635, 36
      %v1120 = vpop.permute.xlu0 %1119
      %1121 = vrot.lane.b32.xlu0 %v637, 36
      %v1122 = vpop.permute.xlu0 %1121
      %1123 = vrot.lane.b32.xlu0 %v638, 36
      %v1124 = vpop.permute.xlu0 %1123
      %1125 = vrot.lane.b32.xlu0 %v640, 36
      %v1126 = vpop.permute.xlu0 %1125
      %1127 = vrot.lane.b32.xlu0 %v641, 36
      %v1128 = vpop.permute.xlu0 %1127
      %1129 = vrot.lane.b32.xlu0 %v643, 36
      %v1130 = vpop.permute.xlu0 %1129
      %1131 = vrot.lane.b32.xlu0 %v644, 36
      %v1132 = vpop.permute.xlu0 %1131
      %1133 = vrot.lane.b32.xlu0 %v646, 36
      %v1134 = vpop.permute.xlu0 %1133
      %1135 = vrot.lane.b32.xlu0 %v647, 36
      %v1136 = vpop.permute.xlu0 %1135
      %1137 = vrot.lane.b32.xlu0 %v649, 36
      %v1138 = vpop.permute.xlu0 %1137
      %1139 = vrot.lane.b32.xlu0 %v650, 36
      %v1140 = vpop.permute.xlu0 %1139
      %1141 = vrot.lane.b32.xlu0 %v652, 36
      %v1142 = vpop.permute.xlu0 %1141
      %1143 = vrot.lane.b32.xlu0 %v653, 36
      %v1144 = vpop.permute.xlu0 %1143
      %1145 = vrot.lane.b32.xlu0 %v655, 36
      %v1146 = vpop.permute.xlu0 %1145
      %1147 = vrot.lane.b32.xlu0 %v656, 36
      %v1148 = vpop.permute.xlu0 %1147
      %1149 = vrot.lane.b32.xlu0 %v658, 36
      %v1150 = vpop.permute.xlu0 %1149
      %1151 = vrot.lane.b32.xlu0 %v659, 36
      %v1152 = vpop.permute.xlu0 %1151
      %1153 = vrot.lane.b32.xlu0 %v661, 36
      %v1154 = vpop.permute.xlu0 %1153
      %1155 = vrot.lane.b32.xlu0 %v662, 36
      %v1156 = vpop.permute.xlu0 %1155
      %1157 = vrot.lane.b32.xlu0 %v664, 36
      %v1158 = vpop.permute.xlu0 %1157
      %1159 = vrot.lane.b32.xlu0 %v665, 36
      %v1160 = vpop.permute.xlu0 %1159
      %1161 = vrot.lane.b32.xlu0 %v667, 36
      %v1162 = vpop.permute.xlu0 %1161
      %1163 = vrot.lane.b32.xlu0 %v668, 36
      %v1164 = vpop.permute.xlu0 %1163
      %1197 = vrot.lane.b32.xlu0 %v729, 48
      %v1198 = vpop.permute.xlu0 %1197
      %1199 = vrot.lane.b32.xlu0 %v731, 48
      %v1200 = vpop.permute.xlu0 %1199
      %1201 = vrot.lane.b32.xlu0 %v734, 48
      %v1202 = vpop.permute.xlu0 %1201
      %1203 = vrot.lane.b32.xlu0 %v736, 48
      %v1204 = vpop.permute.xlu0 %1203
      %1205 = vrot.lane.b32.xlu0 %v739, 48
      %v1206 = vpop.permute.xlu0 %1205
      %1207 = vrot.lane.b32.xlu0 %v741, 48
      %v1208 = vpop.permute.xlu0 %1207
      %1209 = vrot.lane.b32.xlu0 %v744, 48
      %v1210 = vpop.permute.xlu0 %1209
      %1211 = vrot.lane.b32.xlu0 %v746, 48
      %v1212 = vpop.permute.xlu0 %1211
      %1213 = vrot.lane.b32.xlu0 %v749, 48
      %v1214 = vpop.permute.xlu0 %1213
      %1215 = vrot.lane.b32.xlu0 %v751, 48
      %v1216 = vpop.permute.xlu0 %1215
      %1217 = vrot.lane.b32.xlu0 %v754, 48
      %v1218 = vpop.permute.xlu0 %1217
      %1219 = vrot.lane.b32.xlu0 %v756, 48
      %v1220 = vpop.permute.xlu0 %1219
      %1221 = vrot.lane.b32.xlu0 %v759, 48
      %v1222 = vpop.permute.xlu0 %1221
      %1223 = vrot.lane.b32.xlu0 %v761, 48
      %v1224 = vpop.permute.xlu0 %1223
      %1225 = vrot.lane.b32.xlu0 %v764, 48
      %v1226 = vpop.permute.xlu0 %1225
      %1227 = vrot.lane.b32.xlu0 %v766, 48
      %v1228 = vpop.permute.xlu0 %1227
      %1229 = vrot.lane.b32.xlu0 %v769, 48
      %v1230 = vpop.permute.xlu0 %1229
      %1231 = vrot.lane.b32.xlu0 %v771, 48
      %v1232 = vpop.permute.xlu0 %1231
      %1233 = vrot.lane.b32.xlu0 %v774, 48
      %v1234 = vpop.permute.xlu0 %1233
      %1235 = vrot.lane.b32.xlu0 %v776, 48
      %v1236 = vpop.permute.xlu0 %1235
      %1237 = vrot.lane.b32.xlu0 %v779, 48
      %v1238 = vpop.permute.xlu0 %1237
      %1239 = vrot.lane.b32.xlu0 %v781, 48
      %v1240 = vpop.permute.xlu0 %1239
      %1241 = vrot.lane.b32.xlu0 %v784, 48
      %v1242 = vpop.permute.xlu0 %1241
      %1243 = vrot.lane.b32.xlu0 %v786, 48
      %v1244 = vpop.permute.xlu0 %1243
      %1245 = vrot.lane.b32.xlu0 %v789, 48
      %v1246 = vpop.permute.xlu0 %1245
      %1247 = vrot.lane.b32.xlu0 %v791, 48
      %v1248 = vpop.permute.xlu0 %1247
      %1249 = vrot.lane.b32.xlu0 %v794, 48
      %v1250 = vpop.permute.xlu0 %1249
      %1251 = vrot.lane.b32.xlu0 %v796, 48
      %v1252 = vpop.permute.xlu0 %1251
      %1253 = vrot.lane.b32.xlu0 %v799, 48
      %v1254 = vpop.permute.xlu0 %1253
      %1255 = vrot.lane.b32.xlu0 %v801, 48
      %v1256 = vpop.permute.xlu0 %1255
      %1257 = vrot.lane.b32.xlu0 %v888, 48
      %v1258 = vpop.permute.xlu0 %1257
      %1259 = vrot.lane.b32.xlu0 %v890, 48
      %v1260 = vpop.permute.xlu0 %1259
      %1293 = vrot.lane.b32.xlu0 %v810, 60
      %v1294 = vpop.permute.xlu0 %1293
      %1295 = vrot.lane.b32.xlu0 %v812, 60
      %v1296 = vpop.permute.xlu0 %1295
      %1297 = vrot.lane.b32.xlu0 %v815, 60
      %v1298 = vpop.permute.xlu0 %1297
      %1299 = vrot.lane.b32.xlu0 %v817, 60
      %v1300 = vpop.permute.xlu0 %1299
      %1301 = vrot.lane.b32.xlu0 %v820, 60
      %v1302 = vpop.permute.xlu0 %1301
      %1303 = vrot.lane.b32.xlu0 %v822, 60
      %v1304 = vpop.permute.xlu0 %1303
      %1305 = vrot.lane.b32.xlu0 %v825, 60
      %v1306 = vpop.permute.xlu0 %1305
      %1307 = vrot.lane.b32.xlu0 %v827, 60
      %v1308 = vpop.permute.xlu0 %1307
      %1309 = vrot.lane.b32.xlu0 %v830, 60
      %v1310 = vpop.permute.xlu0 %1309
      %1311 = vrot.lane.b32.xlu0 %v832, 60
      %v1312 = vpop.permute.xlu0 %1311
      %1313 = vrot.lane.b32.xlu0 %v835, 60
      %v1314 = vpop.permute.xlu0 %1313
      %1315 = vrot.lane.b32.xlu0 %v837, 60
      %v1316 = vpop.permute.xlu0 %1315
      %1317 = vrot.lane.b32.xlu0 %v840, 60
      %v1318 = vpop.permute.xlu0 %1317
      %1319 = vrot.lane.b32.xlu0 %v842, 60
      %v1320 = vpop.permute.xlu0 %1319
      %1321 = vrot.lane.b32.xlu0 %v845, 60
      %v1322 = vpop.permute.xlu0 %1321
      %1323 = vrot.lane.b32.xlu0 %v847, 60
      %v1324 = vpop.permute.xlu0 %1323
      %1325 = vrot.lane.b32.xlu0 %v850, 60
      %v1326 = vpop.permute.xlu0 %1325
      %1327 = vrot.lane.b32.xlu0 %v852, 60
      %v1328 = vpop.permute.xlu0 %1327
      %1329 = vrot.lane.b32.xlu0 %v855, 60
      %v1330 = vpop.permute.xlu0 %1329
      %1331 = vrot.lane.b32.xlu0 %v857, 60
      %v1332 = vpop.permute.xlu0 %1331
      %1333 = vrot.lane.b32.xlu0 %v860, 60
      %v1334 = vpop.permute.xlu0 %1333
      %1335 = vrot.lane.b32.xlu0 %v862, 60
      %v1336 = vpop.permute.xlu0 %1335
      %1337 = vrot.lane.b32.xlu0 %v865, 60
      %v1338 = vpop.permute.xlu0 %1337
      %1339 = vrot.lane.b32.xlu0 %v867, 60
      %v1340 = vpop.permute.xlu0 %1339
      %1341 = vrot.lane.b32.xlu0 %v870, 60
      %v1342 = vpop.permute.xlu0 %1341
      %1343 = vrot.lane.b32.xlu0 %v872, 60
      %v1344 = vpop.permute.xlu0 %1343
      %1345 = vrot.lane.b32.xlu0 %v875, 60
      %v1346 = vpop.permute.xlu0 %1345
      %1347 = vrot.lane.b32.xlu0 %v877, 60
      %v1348 = vpop.permute.xlu0 %1347
      %1349 = vrot.lane.b32.xlu0 %v880, 60
      %v1350 = vpop.permute.xlu0 %1349
      %1351 = vrot.lane.b32.xlu0 %v882, 60
      %v1352 = vpop.permute.xlu0 %1351
      %1353 = vrot.lane.b32.xlu0 %v893, 60
      %v1354 = vpop.permute.xlu0 %1353
      %1355 = vrot.lane.b32.xlu0 %v895, 60
      %v1356 = vpop.permute.xlu0 %1355
      %1389 = vrot.lane.b32.xlu0 %v625, 72
      %v1390 = vpop.permute.xlu0 %1389
      %1391 = vrot.lane.b32.xlu0 %v626, 72
      %v1392 = vpop.permute.xlu0 %1391
      %1393 = vrot.lane.b32.xlu0 %v628, 72
      %v1394 = vpop.permute.xlu0 %1393
      %1395 = vrot.lane.b32.xlu0 %v629, 72
      %v1396 = vpop.permute.xlu0 %1395
      %1397 = vrot.lane.b32.xlu0 %v631, 72
      %v1398 = vpop.permute.xlu0 %1397
      %1399 = vrot.lane.b32.xlu0 %v632, 72
      %v1400 = vpop.permute.xlu0 %1399
      %1401 = vrot.lane.b32.xlu0 %v634, 72
      %v1402 = vpop.permute.xlu0 %1401
      %1403 = vrot.lane.b32.xlu0 %v635, 72
      %v1404 = vpop.permute.xlu0 %1403
      %1405 = vrot.lane.b32.xlu0 %v637, 72
      %v1406 = vpop.permute.xlu0 %1405
      %1407 = vrot.lane.b32.xlu0 %v638, 72
      %v1408 = vpop.permute.xlu0 %1407
      %1409 = vrot.lane.b32.xlu0 %v640, 72
      %v1410 = vpop.permute.xlu0 %1409
      %1411 = vrot.lane.b32.xlu0 %v641, 72
      %v1412 = vpop.permute.xlu0 %1411
      %1413 = vrot.lane.b32.xlu0 %v643, 72
      %v1414 = vpop.permute.xlu0 %1413
      %1415 = vrot.lane.b32.xlu0 %v644, 72
      %v1416 = vpop.permute.xlu0 %1415
      %1417 = vrot.lane.b32.xlu0 %v646, 72
      %v1418 = vpop.permute.xlu0 %1417
      %1419 = vrot.lane.b32.xlu0 %v647, 72
      %v1420 = vpop.permute.xlu0 %1419
      %1421 = vrot.lane.b32.xlu0 %v649, 72
      %v1422 = vpop.permute.xlu0 %1421
      %1423 = vrot.lane.b32.xlu0 %v650, 72
      %v1424 = vpop.permute.xlu0 %1423
      %1425 = vrot.lane.b32.xlu0 %v652, 72
      %v1426 = vpop.permute.xlu0 %1425
      %1427 = vrot.lane.b32.xlu0 %v653, 72
      %v1428 = vpop.permute.xlu0 %1427
      %1429 = vrot.lane.b32.xlu0 %v655, 72
      %v1430 = vpop.permute.xlu0 %1429
      %1431 = vrot.lane.b32.xlu0 %v656, 72
      %v1432 = vpop.permute.xlu0 %1431
      %1433 = vrot.lane.b32.xlu0 %v658, 72
      %v1434 = vpop.permute.xlu0 %1433
      %1435 = vrot.lane.b32.xlu0 %v659, 72
      %v1436 = vpop.permute.xlu0 %1435
      %1437 = vrot.lane.b32.xlu0 %v661, 72
      %v1438 = vpop.permute.xlu0 %1437
      %1439 = vrot.lane.b32.xlu0 %v662, 72
      %v1440 = vpop.permute.xlu0 %1439
      %1441 = vrot.lane.b32.xlu0 %v664, 72
      %v1442 = vpop.permute.xlu0 %1441
      %1443 = vrot.lane.b32.xlu0 %v665, 72
      %v1444 = vpop.permute.xlu0 %1443
      %1445 = vrot.lane.b32.xlu0 %v667, 72
      %v1446 = vpop.permute.xlu0 %1445
      %1447 = vrot.lane.b32.xlu0 %v668, 72
      %v1448 = vpop.permute.xlu0 %1447
      %1449 = vrot.lane.b32.xlu0 %v670, 72
      %v1450 = vpop.permute.xlu0 %1449
      %1451 = vrot.lane.b32.xlu0 %v671, 72
      %v1452 = vpop.permute.xlu0 %1451
      %1485 = vrot.lane.b32.xlu0 %v734, 84
      %v1486 = vpop.permute.xlu0 %1485
      %1487 = vrot.lane.b32.xlu0 %v736, 84
      %v1488 = vpop.permute.xlu0 %1487
      %1489 = vrot.lane.b32.xlu0 %v739, 84
      %v1490 = vpop.permute.xlu0 %1489
      %1491 = vrot.lane.b32.xlu0 %v741, 84
      %v1492 = vpop.permute.xlu0 %1491
      %1493 = vrot.lane.b32.xlu0 %v744, 84
      %v1494 = vpop.permute.xlu0 %1493
      %1495 = vrot.lane.b32.xlu0 %v746, 84
      %v1496 = vpop.permute.xlu0 %1495
      %1497 = vrot.lane.b32.xlu0 %v749, 84
      %v1498 = vpop.permute.xlu0 %1497
      %1499 = vrot.lane.b32.xlu0 %v751, 84
      %v1500 = vpop.permute.xlu0 %1499
      %1501 = vrot.lane.b32.xlu0 %v754, 84
      %v1502 = vpop.permute.xlu0 %1501
      %1503 = vrot.lane.b32.xlu0 %v756, 84
      %v1504 = vpop.permute.xlu0 %1503
      %1505 = vrot.lane.b32.xlu0 %v759, 84
      %v1506 = vpop.permute.xlu0 %1505
      %1507 = vrot.lane.b32.xlu0 %v761, 84
      %v1508 = vpop.permute.xlu0 %1507
      %1509 = vrot.lane.b32.xlu0 %v764, 84
      %v1510 = vpop.permute.xlu0 %1509
      %1511 = vrot.lane.b32.xlu0 %v766, 84
      %v1512 = vpop.permute.xlu0 %1511
      %1513 = vrot.lane.b32.xlu0 %v769, 84
      %v1514 = vpop.permute.xlu0 %1513
      %1515 = vrot.lane.b32.xlu0 %v771, 84
      %v1516 = vpop.permute.xlu0 %1515
      %1517 = vrot.lane.b32.xlu0 %v774, 84
      %v1518 = vpop.permute.xlu0 %1517
      %1519 = vrot.lane.b32.xlu0 %v776, 84
      %v1520 = vpop.permute.xlu0 %1519
      %1521 = vrot.lane.b32.xlu0 %v779, 84
      %v1522 = vpop.permute.xlu0 %1521
      %1523 = vrot.lane.b32.xlu0 %v781, 84
      %v1524 = vpop.permute.xlu0 %1523
      %1525 = vrot.lane.b32.xlu0 %v784, 84
      %v1526 = vpop.permute.xlu0 %1525
      %1527 = vrot.lane.b32.xlu0 %v786, 84
      %v1528 = vpop.permute.xlu0 %1527
      %1529 = vrot.lane.b32.xlu0 %v789, 84
      %v1530 = vpop.permute.xlu0 %1529
      %1531 = vrot.lane.b32.xlu0 %v791, 84
      %v1532 = vpop.permute.xlu0 %1531
      %1533 = vrot.lane.b32.xlu0 %v794, 84
      %v1534 = vpop.permute.xlu0 %1533
      %1535 = vrot.lane.b32.xlu0 %v796, 84
      %v1536 = vpop.permute.xlu0 %1535
      %1537 = vrot.lane.b32.xlu0 %v799, 84
      %v1538 = vpop.permute.xlu0 %1537
      %1539 = vrot.lane.b32.xlu0 %v801, 84
      %v1540 = vpop.permute.xlu0 %1539
      %1541 = vrot.lane.b32.xlu0 %v888, 84
      %v1542 = vpop.permute.xlu0 %1541
      %1543 = vrot.lane.b32.xlu0 %v890, 84
      %v1544 = vpop.permute.xlu0 %1543
      %1545 = vrot.lane.b32.xlu0 %v901, 84
      %v1546 = vpop.permute.xlu0 %1545
      %1547 = vrot.lane.b32.xlu0 %v903, 84
      %v1548 = vpop.permute.xlu0 %1547
      %1581 = vrot.lane.b32.xlu0 %v815, 96
      %v1582 = vpop.permute.xlu0 %1581
      %1583 = vrot.lane.b32.xlu0 %v817, 96
      %v1584 = vpop.permute.xlu0 %1583
      %1585 = vrot.lane.b32.xlu0 %v820, 96
      %v1586 = vpop.permute.xlu0 %1585
      %1587 = vrot.lane.b32.xlu0 %v822, 96
      %v1588 = vpop.permute.xlu0 %1587
      %1589 = vrot.lane.b32.xlu0 %v825, 96
      %v1590 = vpop.permute.xlu0 %1589
      %1591 = vrot.lane.b32.xlu0 %v827, 96
      %v1592 = vpop.permute.xlu0 %1591
      %1593 = vrot.lane.b32.xlu0 %v830, 96
      %v1594 = vpop.permute.xlu0 %1593
      %1595 = vrot.lane.b32.xlu0 %v832, 96
      %v1596 = vpop.permute.xlu0 %1595
      %1597 = vrot.lane.b32.xlu0 %v835, 96
      %v1598 = vpop.permute.xlu0 %1597
      %1599 = vrot.lane.b32.xlu0 %v837, 96
      %v1600 = vpop.permute.xlu0 %1599
      %1601 = vrot.lane.b32.xlu0 %v840, 96
      %v1602 = vpop.permute.xlu0 %1601
      %1603 = vrot.lane.b32.xlu0 %v842, 96
      %v1604 = vpop.permute.xlu0 %1603
      %1605 = vrot.lane.b32.xlu0 %v845, 96
      %v1606 = vpop.permute.xlu0 %1605
      %1607 = vrot.lane.b32.xlu0 %v847, 96
      %v1608 = vpop.permute.xlu0 %1607
      %1609 = vrot.lane.b32.xlu0 %v850, 96
      %v1610 = vpop.permute.xlu0 %1609
      %1611 = vrot.lane.b32.xlu0 %v852, 96
      %v1612 = vpop.permute.xlu0 %1611
      %1613 = vrot.lane.b32.xlu0 %v855, 96
      %v1614 = vpop.permute.xlu0 %1613
      %1615 = vrot.lane.b32.xlu0 %v857, 96
      %v1616 = vpop.permute.xlu0 %1615
      %1617 = vrot.lane.b32.xlu0 %v860, 96
      %v1618 = vpop.permute.xlu0 %1617
      %1619 = vrot.lane.b32.xlu0 %v862, 96
      %v1620 = vpop.permute.xlu0 %1619
      %1621 = vrot.lane.b32.xlu0 %v865, 96
      %v1622 = vpop.permute.xlu0 %1621
      %1623 = vrot.lane.b32.xlu0 %v867, 96
      %v1624 = vpop.permute.xlu0 %1623
      %1625 = vrot.lane.b32.xlu0 %v870, 96
      %v1626 = vpop.permute.xlu0 %1625
      %1627 = vrot.lane.b32.xlu0 %v872, 96
      %v1628 = vpop.permute.xlu0 %1627
      %1629 = vrot.lane.b32.xlu0 %v875, 96
      %v1630 = vpop.permute.xlu0 %1629
      %1631 = vrot.lane.b32.xlu0 %v877, 96
      %v1632 = vpop.permute.xlu0 %1631
      %1633 = vrot.lane.b32.xlu0 %v880, 96
      %v1634 = vpop.permute.xlu0 %1633
      %1635 = vrot.lane.b32.xlu0 %v882, 96
      %v1636 = vpop.permute.xlu0 %1635
      %1637 = vrot.lane.b32.xlu0 %v893, 96
      %v1638 = vpop.permute.xlu0 %1637
      %1639 = vrot.lane.b32.xlu0 %v895, 96
      %v1640 = vpop.permute.xlu0 %1639
      %1641 = vrot.lane.b32.xlu0 %v906, 96
      %v1642 = vpop.permute.xlu0 %1641
      %1643 = vrot.lane.b32.xlu0 %v908, 96
      %v1644 = vpop.permute.xlu0 %1643
      %v1677 = vsel %vm305, %v619, %v910
      %v1678 = vsel %vm305, %v620, %v912
      %v1679 = vsel %vm305, %v622, %v914
      %v1680 = vsel %vm305, %v623, %v916
      %v1681 = vsel %vm305, %v625, %v918
      %v1682 = vsel %vm305, %v626, %v920
      %v1683 = vsel %vm305, %v628, %v922
      %v1684 = vsel %vm305, %v629, %v924
      %v1685 = vsel %vm305, %v631, %v926
      %v1686 = vsel %vm305, %v632, %v928
      %v1687 = vsel %vm305, %v634, %v930
      %v1688 = vsel %vm305, %v635, %v932
      %v1689 = vsel %vm305, %v637, %v934
      %v1690 = vsel %vm305, %v638, %v936
      %v1691 = vsel %vm305, %v640, %v938
      %v1692 = vsel %vm305, %v641, %v940
      %v1693 = vsel %vm305, %v643, %v942
      %v1694 = vsel %vm305, %v644, %v944
      %v1695 = vsel %vm305, %v646, %v946
      %v1696 = vsel %vm305, %v647, %v948
      %v1697 = vsel %vm305, %v649, %v950
      %v1698 = vsel %vm305, %v650, %v952
      %v1699 = vsel %vm305, %v652, %v954
      %v1700 = vsel %vm305, %v653, %v956
      %v1701 = vsel %vm305, %v655, %v958
      %v1702 = vsel %vm305, %v656, %v960
      %v1703 = vsel %vm305, %v658, %v962
      %v1704 = vsel %vm305, %v659, %v964
      %v1705 = vsel %vm305, %v661, %v966
      %v1706 = vsel %vm305, %v662, %v968
      %v1707 = vsel %vm305, %v664, %v970
      %v1708 = vsel %vm305, %v665, %v972
      %vm1709 = vcmask 195584
      %v1710 = vsel %vm1709, %v1677, %v1006
      %v1711 = vsel %vm1709, %v1678, %v1008
      %v1712 = vsel %vm1709, %v1679, %v1010
      %v1713 = vsel %vm1709, %v1680, %v1012
      %v1714 = vsel %vm1709, %v1681, %v1014
      %v1715 = vsel %vm1709, %v1682, %v1016
      %v1716 = vsel %vm1709, %v1683, %v1018
      %v1717 = vsel %vm1709, %v1684, %v1020
      %v1718 = vsel %vm1709, %v1685, %v1022
      %v1719 = vsel %vm1709, %v1686, %v1024
      %v1720 = vsel %vm1709, %v1687, %v1026
      %v1721 = vsel %vm1709, %v1688, %v1028
      %v1722 = vsel %vm1709, %v1689, %v1030
      %v1723 = vsel %vm1709, %v1690, %v1032
      %v1724 = vsel %vm1709, %v1691, %v1034
      %v1725 = vsel %vm1709, %v1692, %v1036
      %v1726 = vsel %vm1709, %v1693, %v1038
      %v1727 = vsel %vm1709, %v1694, %v1040
      %v1728 = vsel %vm1709, %v1695, %v1042
      %v1729 = vsel %vm1709, %v1696, %v1044
      %v1730 = vsel %vm1709, %v1697, %v1046
      %v1731 = vsel %vm1709, %v1698, %v1048
      %v1732 = vsel %vm1709, %v1699, %v1050
      %v1733 = vsel %vm1709, %v1700, %v1052
      %v1734 = vsel %vm1709, %v1701, %v1054
      %v1735 = vsel %vm1709, %v1702, %v1056
      %v1736 = vsel %vm1709, %v1703, %v1058
      %v1737 = vsel %vm1709, %v1704, %v1060
      %v1738 = vsel %vm1709, %v1705, %v1062
      %v1739 = vsel %vm1709, %v1706, %v1064
      %v1740 = vsel %vm1709, %v1707, %v1066
      %v1741 = vsel %vm1709, %v1708, %v1068
      %vm1742 = vcmask 293888
      %v1743 = vsel %vm1742, %v1710, %v1102
      %v1744 = vsel %vm1742, %v1711, %v1104
      %v1745 = vsel %vm1742, %v1712, %v1106
      %v1746 = vsel %vm1742, %v1713, %v1108
      %v1747 = vsel %vm1742, %v1714, %v1110
      %v1748 = vsel %vm1742, %v1715, %v1112
      %v1749 = vsel %vm1742, %v1716, %v1114
      %v1750 = vsel %vm1742, %v1717, %v1116
      %v1751 = vsel %vm1742, %v1718, %v1118
      %v1752 = vsel %vm1742, %v1719, %v1120
      %v1753 = vsel %vm1742, %v1720, %v1122
      %v1754 = vsel %vm1742, %v1721, %v1124
      %v1755 = vsel %vm1742, %v1722, %v1126
      %v1756 = vsel %vm1742, %v1723, %v1128
      %v1757 = vsel %vm1742, %v1724, %v1130
      %v1758 = vsel %vm1742, %v1725, %v1132
      %v1759 = vsel %vm1742, %v1726, %v1134
      %v1760 = vsel %vm1742, %v1727, %v1136
      %v1761 = vsel %vm1742, %v1728, %v1138
      %v1762 = vsel %vm1742, %v1729, %v1140
      %v1763 = vsel %vm1742, %v1730, %v1142
      %v1764 = vsel %vm1742, %v1731, %v1144
      %v1765 = vsel %vm1742, %v1732, %v1146
      %v1766 = vsel %vm1742, %v1733, %v1148
      %v1767 = vsel %vm1742, %v1734, %v1150
      %v1768 = vsel %vm1742, %v1735, %v1152
      %v1769 = vsel %vm1742, %v1736, %v1154
      %v1770 = vsel %vm1742, %v1737, %v1156
      %v1771 = vsel %vm1742, %v1738, %v1158
      %v1772 = vsel %vm1742, %v1739, %v1160
      %v1773 = vsel %vm1742, %v1740, %v1162
      %v1774 = vsel %vm1742, %v1741, %v1164
      %vm1775 = vcmask 392192
      %v1776 = vsel %vm1775, %v1743, %v1198
      %v1777 = vsel %vm1775, %v1744, %v1200
      %v1778 = vsel %vm1775, %v1745, %v1202
      %v1779 = vsel %vm1775, %v1746, %v1204
      %v1780 = vsel %vm1775, %v1747, %v1206
      %v1781 = vsel %vm1775, %v1748, %v1208
      %v1782 = vsel %vm1775, %v1749, %v1210
      %v1783 = vsel %vm1775, %v1750, %v1212
      %v1784 = vsel %vm1775, %v1751, %v1214
      %v1785 = vsel %vm1775, %v1752, %v1216
      %v1786 = vsel %vm1775, %v1753, %v1218
      %v1787 = vsel %vm1775, %v1754, %v1220
      %v1788 = vsel %vm1775, %v1755, %v1222
      %v1789 = vsel %vm1775, %v1756, %v1224
      %v1790 = vsel %vm1775, %v1757, %v1226
      %v1791 = vsel %vm1775, %v1758, %v1228
      %v1792 = vsel %vm1775, %v1759, %v1230
      %v1793 = vsel %vm1775, %v1760, %v1232
      %v1794 = vsel %vm1775, %v1761, %v1234
      %v1795 = vsel %vm1775, %v1762, %v1236
      %v1796 = vsel %vm1775, %v1763, %v1238
      %v1797 = vsel %vm1775, %v1764, %v1240
      %v1798 = vsel %vm1775, %v1765, %v1242
      %v1799 = vsel %vm1775, %v1766, %v1244
      %v1800 = vsel %vm1775, %v1767, %v1246
      %v1801 = vsel %vm1775, %v1768, %v1248
      %v1802 = vsel %vm1775, %v1769, %v1250
      %v1803 = vsel %vm1775, %v1770, %v1252
      %v1804 = vsel %vm1775, %v1771, %v1254
      %v1805 = vsel %vm1775, %v1772, %v1256
      %v1806 = vsel %vm1775, %v1773, %v1258
      %v1807 = vsel %vm1775, %v1774, %v1260
      %vm1808 = vcmask 490496
      %v1809 = vsel %vm1808, %v1776, %v1294
      %v1810 = vsel %vm1808, %v1777, %v1296
      %v1811 = vsel %vm1808, %v1778, %v1298
      %v1812 = vsel %vm1808, %v1779, %v1300
      %v1813 = vsel %vm1808, %v1780, %v1302
      %v1814 = vsel %vm1808, %v1781, %v1304
      %v1815 = vsel %vm1808, %v1782, %v1306
      %v1816 = vsel %vm1808, %v1783, %v1308
      %v1817 = vsel %vm1808, %v1784, %v1310
      %v1818 = vsel %vm1808, %v1785, %v1312
      %v1819 = vsel %vm1808, %v1786, %v1314
      %v1820 = vsel %vm1808, %v1787, %v1316
      %v1821 = vsel %vm1808, %v1788, %v1318
      %v1822 = vsel %vm1808, %v1789, %v1320
      %v1823 = vsel %vm1808, %v1790, %v1322
      %v1824 = vsel %vm1808, %v1791, %v1324
      %v1825 = vsel %vm1808, %v1792, %v1326
      %v1826 = vsel %vm1808, %v1793, %v1328
      %v1827 = vsel %vm1808, %v1794, %v1330
      %v1828 = vsel %vm1808, %v1795, %v1332
      %v1829 = vsel %vm1808, %v1796, %v1334
      %v1830 = vsel %vm1808, %v1797, %v1336
      %v1831 = vsel %vm1808, %v1798, %v1338
      %v1832 = vsel %vm1808, %v1799, %v1340
      %v1833 = vsel %vm1808, %v1800, %v1342
      %v1834 = vsel %vm1808, %v1801, %v1344
      %v1835 = vsel %vm1808, %v1802, %v1346
      %v1836 = vsel %vm1808, %v1803, %v1348
      %v1837 = vsel %vm1808, %v1804, %v1350
      %v1838 = vsel %vm1808, %v1805, %v1352
      %v1839 = vsel %vm1808, %v1806, %v1354
      %v1840 = vsel %vm1808, %v1807, %v1356
      %vm1841 = vcmask 588800
      %v1842 = vsel %vm1841, %v1809, %v1390
      %v1843 = vsel %vm1841, %v1810, %v1392
      %v1844 = vsel %vm1841, %v1811, %v1394
      %v1845 = vsel %vm1841, %v1812, %v1396
      %v1846 = vsel %vm1841, %v1813, %v1398
      %v1847 = vsel %vm1841, %v1814, %v1400
      %v1848 = vsel %vm1841, %v1815, %v1402
      %v1849 = vsel %vm1841, %v1816, %v1404
      %v1850 = vsel %vm1841, %v1817, %v1406
      %v1851 = vsel %vm1841, %v1818, %v1408
      %v1852 = vsel %vm1841, %v1819, %v1410
      %v1853 = vsel %vm1841, %v1820, %v1412
      %v1854 = vsel %vm1841, %v1821, %v1414
      %v1855 = vsel %vm1841, %v1822, %v1416
      %v1856 = vsel %vm1841, %v1823, %v1418
      %v1857 = vsel %vm1841, %v1824, %v1420
      %v1858 = vsel %vm1841, %v1825, %v1422
      %v1859 = vsel %vm1841, %v1826, %v1424
      %v1860 = vsel %vm1841, %v1827, %v1426
      %v1861 = vsel %vm1841, %v1828, %v1428
      %v1862 = vsel %vm1841, %v1829, %v1430
      %v1863 = vsel %vm1841, %v1830, %v1432
      %v1864 = vsel %vm1841, %v1831, %v1434
      %v1865 = vsel %vm1841, %v1832, %v1436
      %v1866 = vsel %vm1841, %v1833, %v1438
      %v1867 = vsel %vm1841, %v1834, %v1440
      %v1868 = vsel %vm1841, %v1835, %v1442
      %v1869 = vsel %vm1841, %v1836, %v1444
      %v1870 = vsel %vm1841, %v1837, %v1446
      %v1871 = vsel %vm1841, %v1838, %v1448
      %v1872 = vsel %vm1841, %v1839, %v1450
      %v1873 = vsel %vm1841, %v1840, %v1452
      %vm1874 = vcmask 687104
      %v1875 = vsel %vm1874, %v1842, %v1486
      %v1876 = vsel %vm1874, %v1843, %v1488
      %v1877 = vsel %vm1874, %v1844, %v1490
      %v1878 = vsel %vm1874, %v1845, %v1492
      %v1879 = vsel %vm1874, %v1846, %v1494
      %v1880 = vsel %vm1874, %v1847, %v1496
      %v1881 = vsel %vm1874, %v1848, %v1498
      %v1882 = vsel %vm1874, %v1849, %v1500
      %v1883 = vsel %vm1874, %v1850, %v1502
      %v1884 = vsel %vm1874, %v1851, %v1504
      %v1885 = vsel %vm1874, %v1852, %v1506
      %v1886 = vsel %vm1874, %v1853, %v1508
      %v1887 = vsel %vm1874, %v1854, %v1510
      %v1888 = vsel %vm1874, %v1855, %v1512
      %v1889 = vsel %vm1874, %v1856, %v1514
      %v1890 = vsel %vm1874, %v1857, %v1516
      %v1891 = vsel %vm1874, %v1858, %v1518
      %v1892 = vsel %vm1874, %v1859, %v1520
      %v1893 = vsel %vm1874, %v1860, %v1522
      %v1894 = vsel %vm1874, %v1861, %v1524
      %v1895 = vsel %vm1874, %v1862, %v1526
      %v1896 = vsel %vm1874, %v1863, %v1528
      %v1897 = vsel %vm1874, %v1864, %v1530
      %v1898 = vsel %vm1874, %v1865, %v1532
      %v1899 = vsel %vm1874, %v1866, %v1534
      %v1900 = vsel %vm1874, %v1867, %v1536
      %v1901 = vsel %vm1874, %v1868, %v1538
      %v1902 = vsel %vm1874, %v1869, %v1540
      %v1903 = vsel %vm1874, %v1870, %v1542
      %v1904 = vsel %vm1874, %v1871, %v1544
      %v1905 = vsel %vm1874, %v1872, %v1546
      %v1906 = vsel %vm1874, %v1873, %v1548
      %vm1907 = vcmask 785408
      %v1908 = vsel %vm1907, %v1875, %v1582
      %v1909 = vsel %vm1907, %v1876, %v1584
      %v1910 = vsel %vm1907, %v1877, %v1586
      %v1911 = vsel %vm1907, %v1878, %v1588
      %v1912 = vsel %vm1907, %v1879, %v1590
      %v1913 = vsel %vm1907, %v1880, %v1592
      %v1914 = vsel %vm1907, %v1881, %v1594
      %v1915 = vsel %vm1907, %v1882, %v1596
      %v1916 = vsel %vm1907, %v1883, %v1598
      %v1917 = vsel %vm1907, %v1884, %v1600
      %v1918 = vsel %vm1907, %v1885, %v1602
      %v1919 = vsel %vm1907, %v1886, %v1604
      %v1920 = vsel %vm1907, %v1887, %v1606
      %v1921 = vsel %vm1907, %v1888, %v1608
      %v1922 = vsel %vm1907, %v1889, %v1610
      %v1923 = vsel %vm1907, %v1890, %v1612
      %v1924 = vsel %vm1907, %v1891, %v1614
      %v1925 = vsel %vm1907, %v1892, %v1616
      %v1926 = vsel %vm1907, %v1893, %v1618
      %v1927 = vsel %vm1907, %v1894, %v1620
      %v1928 = vsel %vm1907, %v1895, %v1622
      %v1929 = vsel %vm1907, %v1896, %v1624
      %v1930 = vsel %vm1907, %v1897, %v1626
      %v1931 = vsel %vm1907, %v1898, %v1628
      %v1932 = vsel %vm1907, %v1899, %v1630
      %v1933 = vsel %vm1907, %v1900, %v1632
      %v1934 = vsel %vm1907, %v1901, %v1634
      %v1935 = vsel %vm1907, %v1902, %v1636
      %v1936 = vsel %vm1907, %v1903, %v1638
      %v1937 = vsel %vm1907, %v1904, %v1640
      %v1938 = vsel %vm1907, %v1905, %v1642
      %v1939 = vsel %vm1907, %v1906, %v1644
      %v1940 = vld [vmem:[%s3] sm:$0xff]
      %v1941 = vld [vmem:[%s3 + $0x8] sm:$0xff]
      %v1942 = vld [vmem:[%s3 + $0x10] sm:$0xff]
      %v1943 = vld [vmem:[%s3 + $0x18] sm:$0xff]
      %v1944 = vld [vmem:[%s3 + $0x20] sm:$0xff]
      %v1945 = vld [vmem:[%s3 + $0x28] sm:$0xff]
      %v1946 = vld [vmem:[%s3 + $0x30] sm:$0xff]
      %v1947 = vld [vmem:[%s3 + $0x38] sm:$0xff]
      %v1948 = vld [vmem:[%s3 + $0x40] sm:$0xff]
      %v1949 = vld [vmem:[%s3 + $0x48] sm:$0xff]
      %v1950 = vld [vmem:[%s3 + $0x50] sm:$0xff]
      %v1951 = vld [vmem:[%s3 + $0x58] sm:$0xff]
      %v1952 = vld [vmem:[%s3 + $0x60] sm:$0xff]
      %v1953 = vld [vmem:[%s3 + $0x68] sm:$0xf]
      %vm1954 = vcmask 883712
      %v1956 = vsel %vm1954, %v1908, 0
      %v1959 = vsel %vm1954, %v1909, 0
      %v1962 = vsel %vm1954, %v1910, 0
      %v1965 = vsel %vm1954, %v1911, 0
      %v1968 = vsel %vm1954, %v1912, 0
      %v1971 = vsel %vm1954, %v1913, 0
      %v1974 = vsel %vm1954, %v1914, 0
      %v1977 = vsel %vm1954, %v1915, 0
      %v1980 = vsel %vm1954, %v1916, 0
      %v1983 = vsel %vm1954, %v1917, 0
      %v1986 = vsel %vm1954, %v1918, 0
      %v1989 = vsel %vm1954, %v1919, 0
      %v1992 = vsel %vm1954, %v1920, 0
      %v1995 = vsel %vm1954, %v1921, 0
      %v1998 = vsel %vm1954, %v1922, 0
      %v2001 = vsel %vm1954, %v1923, 0
      %v2004 = vsel %vm1954, %v1924, 0
      %v2007 = vsel %vm1954, %v1925, 0
      %v2010 = vsel %vm1954, %v1926, 0
      %v2013 = vsel %vm1954, %v1927, 0
      %v2016 = vsel %vm1954, %v1928, 0
      %v2019 = vsel %vm1954, %v1929, 0
      %v2022 = vsel %vm1954, %v1930, 0
      %v2025 = vsel %vm1954, %v1931, 0
      %v2028 = vsel %vm1954, %v1932, 0
      %v2031 = vsel %vm1954, %v1933, 0
      %v2034 = vsel %vm1954, %v1934, 0
      %v2037 = vsel %vm1954, %v1935, 0
      %v2040 = vsel %vm1954, %v1936, 0
      %v2043 = vsel %vm1954, %v1937, 0
      %v2046 = vsel %vm1954, %v1938, 0
      %v2049 = vsel %vm1954, %v1939, 0
      %vm2051 = vcmask 1043456
      %v2053 = vsel %vm2051, %v1953, 0
      %2055 = vmatpush.msra.mxu0 0.0
      %2056 = vmatpush.msra.mxu0 0.0
      %2057 = vmatpush.msra.mxu0 %v2053
      %2058 = vmatpush.msra.mxu0 %v1952
      %2059 = vmatpush.msra.mxu0 %v1951
      %2060 = vmatpush.msra.mxu0 %v1950
      %2061 = vmatpush.msra.mxu0 %v1949
      %2062 = vmatpush.msra.mxu0 %v1948
      %2063 = vmatpush.msra.mxu0 %v1947
      %2064 = vmatpush.msra.mxu0 %v1946
      %2065 = vmatpush.msra.mxu0 %v1945
      %2066 = vmatpush.msra.mxu0 %v1944
      %2067 = vmatpush.msra.mxu0 %v1943
      %2068 = vmatpush.msra.mxu0 %v1942
      %2069 = vmatpush.msra.mxu0 %v1941
      %2070 = vmatpush.msra.mxu0 %v1940
      %2071 = vmatmul.f32.gmra.mxu0 %v1956
      %v2072 = vpop.f32.mrf.mxu0
      %v2073 = vadd.f32 0.0, %v2072
      %2074 = vmatmul.f32.gmra.mxu0 %v1959
      %v2075 = vpop.f32.mrf.mxu0
      %v2076 = vadd.f32 0.0, %v2075
      %2077 = vmatmul.f32.gmra.mxu0 %v1962
      %v2078 = vpop.f32.mrf.mxu0
      %v2079 = vadd.f32 0.0, %v2078
      %2080 = vmatmul.f32.gmra.mxu0 %v1965
      %v2081 = vpop.f32.mrf.mxu0
      %v2082 = vadd.f32 0.0, %v2081
      %2083 = vmatmul.f32.gmra.mxu0 %v1968
      %v2084 = vpop.f32.mrf.mxu0
      %v2085 = vadd.f32 0.0, %v2084
      %2086 = vmatmul.f32.gmra.mxu0 %v1971
      %v2087 = vpop.f32.mrf.mxu0
      %v2088 = vadd.f32 0.0, %v2087
      %2089 = vmatmul.f32.gmra.mxu0 %v1974
      %v2090 = vpop.f32.mrf.mxu0
      %v2091 = vadd.f32 0.0, %v2090
      %2092 = vmatmul.f32.gmra.mxu0 %v1977
      %v2093 = vpop.f32.mrf.mxu0
      %v2094 = vadd.f32 0.0, %v2093
      %2095 = vmatmul.f32.gmra.mxu0 %v1980
      %v2096 = vpop.f32.mrf.mxu0
      %v2097 = vadd.f32 0.0, %v2096
      %2098 = vmatmul.f32.gmra.mxu0 %v1983
      %v2099 = vpop.f32.mrf.mxu0
      %v2100 = vadd.f32 0.0, %v2099
      %2101 = vmatmul.f32.gmra.mxu0 %v1986
      %v2102 = vpop.f32.mrf.mxu0
      %v2103 = vadd.f32 0.0, %v2102
      %2104 = vmatmul.f32.gmra.mxu0 %v1989
      %v2105 = vpop.f32.mrf.mxu0
      %v2106 = vadd.f32 0.0, %v2105
      %2107 = vmatmul.f32.gmra.mxu0 %v1992
      %v2108 = vpop.f32.mrf.mxu0
      %v2109 = vadd.f32 0.0, %v2108
      %2110 = vmatmul.f32.gmra.mxu0 %v1995
      %v2111 = vpop.f32.mrf.mxu0
      %v2112 = vadd.f32 0.0, %v2111
      %2113 = vmatmul.f32.gmra.mxu0 %v1998
      %v2114 = vpop.f32.mrf.mxu0
      %v2115 = vadd.f32 0.0, %v2114
      %2116 = vmatmul.f32.gmra.mxu0 %v2001
      %v2117 = vpop.f32.mrf.mxu0
      %v2118 = vadd.f32 0.0, %v2117
      %2119 = vmatmul.f32.gmra.mxu0 %v2004
      %v2120 = vpop.f32.mrf.mxu0
      %v2121 = vadd.f32 0.0, %v2120
      %2122 = vmatmul.f32.gmra.mxu0 %v2007
      %v2123 = vpop.f32.mrf.mxu0
      %v2124 = vadd.f32 0.0, %v2123
      %2125 = vmatmul.f32.gmra.mxu0 %v2010
      %v2126 = vpop.f32.mrf.mxu0
      %v2127 = vadd.f32 0.0, %v2126
      %2128 = vmatmul.f32.gmra.mxu0 %v2013
      %v2129 = vpop.f32.mrf.mxu0
      %v2130 = vadd.f32 0.0, %v2129
      %2131 = vmatmul.f32.gmra.mxu0 %v2016
      %v2132 = vpop.f32.mrf.mxu0
      %v2133 = vadd.f32 0.0, %v2132
      %2134 = vmatmul.f32.gmra.mxu0 %v2019
      %v2135 = vpop.f32.mrf.mxu0
      %v2136 = vadd.f32 0.0, %v2135
      %2137 = vmatmul.f32.gmra.mxu0 %v2022
      %v2138 = vpop.f32.mrf.mxu0
      %v2139 = vadd.f32 0.0, %v2138
      %2140 = vmatmul.f32.gmra.mxu0 %v2025
      %v2141 = vpop.f32.mrf.mxu0
      %v2142 = vadd.f32 0.0, %v2141
      %2143 = vmatmul.f32.gmra.mxu0 %v2028
      %v2144 = vpop.f32.mrf.mxu0
      %v2145 = vadd.f32 0.0, %v2144
      %2146 = vmatmul.f32.gmra.mxu0 %v2031
      %v2147 = vpop.f32.mrf.mxu0
      %v2148 = vadd.f32 0.0, %v2147
      %2149 = vmatmul.f32.gmra.mxu0 %v2034
      %v2150 = vpop.f32.mrf.mxu0
      %v2151 = vadd.f32 0.0, %v2150
      %2152 = vmatmul.f32.gmra.mxu0 %v2037
      %v2153 = vpop.f32.mrf.mxu0
      %v2154 = vadd.f32 0.0, %v2153
      %2155 = vmatmul.f32.gmra.mxu0 %v2040
      %v2156 = vpop.f32.mrf.mxu0
      %v2157 = vadd.f32 0.0, %v2156
      %2158 = vmatmul.f32.gmra.mxu0 %v2043
      %v2159 = vpop.f32.mrf.mxu0
      %v2160 = vadd.f32 0.0, %v2159
      %2161 = vmatmul.f32.gmra.mxu0 %v2046
      %v2162 = vpop.f32.mrf.mxu0
      %v2163 = vadd.f32 0.0, %v2162
      %2164 = vmatmul.f32.gmra.mxu0 %v2049
      %v2165 = vpop.f32.mrf.mxu0
      %v2166 = vadd.f32 0.0, %v2165
      %2167 = vdwg.mxu0
      %2168 = vxpose.xlu0.b32.start [1/16] %v2073, 128
      %2169 = vxpose.xlu0.b32.cont [2/16] %v2076, 128
      %2170 = vxpose.xlu0.b32.cont [3/16] %v2079, 128
      %2171 = vxpose.xlu0.b32.cont [4/16] %v2082, 128
      %2172 = vxpose.xlu0.b32.cont [5/16] %v2085, 128
      %2173 = vxpose.xlu0.b32.cont [6/16] %v2088, 128
      %2174 = vxpose.xlu0.b32.cont [7/16] %v2091, 128
      %2175 = vxpose.xlu0.b32.cont [8/16] %v2094, 128
      %2176 = vxpose.xlu0.b32.cont [9/16] %v2097, 128
      %2177 = vxpose.xlu0.b32.cont [10/16] %v2100, 128
      %2178 = vxpose.xlu0.b32.cont [11/16] %v2103, 128
      %2179 = vxpose.xlu0.b32.cont [12/16] %v2106, 128
      %2180 = vxpose.xlu0.b32.cont [13/16] %v2109, 128
      %2181 = vxpose.xlu0.b32.cont [14/16] %v2112, 128
      %2182 = vxpose.xlu0.b32.cont [15/16] %v2115, 128
      %2183 = vxpose.xlu0.b32.end [16/16] %v2118, 128
      %v2184 = vpop.trf.xlu0
      %v2185 = vpop.trf.xlu0
      %v2186 = vpop.trf.xlu0
      %v2187 = vpop.trf.xlu0
      %v2188 = vpop.trf.xlu0
      %v2189 = vpop.trf.xlu0
      %v2190 = vpop.trf.xlu0
      %v2191 = vpop.trf.xlu0
      %v2192 = vpop.trf.xlu0
      %v2193 = vpop.trf.xlu0
      %v2194 = vpop.trf.xlu0
      %v2195 = vpop.trf.xlu0
      %v2196 = vpop.trf.xlu0
      %v2197 = vpop.trf.xlu0
      %v2198 = vpop.trf.xlu0
      %v2199 = vpop.trf.xlu0
      %2200 = vxpose.xlu0.b32.start [1/16] %v2121, 128
      %2201 = vxpose.xlu0.b32.cont [2/16] %v2124, 128
      %2202 = vxpose.xlu0.b32.cont [3/16] %v2127, 128
      %2203 = vxpose.xlu0.b32.cont [4/16] %v2130, 128
      %2204 = vxpose.xlu0.b32.cont [5/16] %v2133, 128
      %2205 = vxpose.xlu0.b32.cont [6/16] %v2136, 128
      %2206 = vxpose.xlu0.b32.cont [7/16] %v2139, 128
      %2207 = vxpose.xlu0.b32.cont [8/16] %v2142, 128
      %2208 = vxpose.xlu0.b32.cont [9/16] %v2145, 128
      %2209 = vxpose.xlu0.b32.cont [10/16] %v2148, 128
      %2210 = vxpose.xlu0.b32.cont [11/16] %v2151, 128
      %2211 = vxpose.xlu0.b32.cont [12/16] %v2154, 128
      %2212 = vxpose.xlu0.b32.cont [13/16] %v2157, 128
      %2213 = vxpose.xlu0.b32.cont [14/16] %v2160, 128
      %2214 = vxpose.xlu0.b32.cont [15/16] %v2163, 128
      %2215 = vxpose.xlu0.b32.end [16/16] %v2166, 128
      %v2216 = vpop.trf.xlu0
      %v2217 = vpop.trf.xlu0
      %v2218 = vpop.trf.xlu0
      %v2219 = vpop.trf.xlu0
      %v2220 = vpop.trf.xlu0
      %v2221 = vpop.trf.xlu0
      %v2222 = vpop.trf.xlu0
      %v2223 = vpop.trf.xlu0
      %v2224 = vpop.trf.xlu0
      %v2225 = vpop.trf.xlu0
      %v2226 = vpop.trf.xlu0
      %v2227 = vpop.trf.xlu0
      %v2228 = vpop.trf.xlu0
      %v2229 = vpop.trf.xlu0
      %v2230 = vpop.trf.xlu0
      %v2231 = vpop.trf.xlu0
      %v2232 = vld [vmem:[%s4] sm:$0xff]
      %v2233 = vld [vmem:[%s4 + $0x8] sm:$0xff]
      %v2234 = vld [vmem:[%s4 + $0x10] sm:$0xff]
      %v2235 = vld [vmem:[%s4 + $0x18] sm:$0xff]
      %2237 = vset.pattern.permute.xlu0 0
      %2238 = vperm.xlu0 %2237, %v2232
      %v2239 = vpop.permute.xlu0 %2238
      %2242 = vset.pattern.permute.xlu0 0
      %2243 = vperm.xlu0 %2242, %v2233
      %v2244 = vpop.permute.xlu0 %2243
      %2247 = vset.pattern.permute.xlu0 0
      %2248 = vperm.xlu0 %2247, %v2234
      %v2249 = vpop.permute.xlu0 %2248
      %2252 = vset.pattern.permute.xlu0 0
      %2253 = vperm.xlu0 %2252, %v2235
      %v2254 = vpop.permute.xlu0 %2253
      %v2256 = vadd.f32 %v2184, %v2239
      %v2257 = vadd.f32 %v2216, %v2239
      %v2258 = vadd.f32 %v2185, %v2244
      %v2259 = vadd.f32 %v2217, %v2244
      %v2260 = vadd.f32 %v2186, %v2249
      %v2261 = vadd.f32 %v2218, %v2249
      %v2262 = vadd.f32 %v2187, %v2254
      %v2263 = vadd.f32 %v2219, %v2254
      %v2264 = vxor.u32 %v2256, 2147483648
      %v2265 = vxor.u32 %v2257, 2147483648
      %v2266 = vmul.f32 %v2264, 1.442695
      %v2267 = vpow.pop %v2266
      %v2268 = vmul.f32 %v2265, 1.442695
      %v2269 = vpow.pop %v2268
      %v2270 = vadd.f32 %v2267, 1.0
      %v2271 = vadd.f32 %v2269, 1.0
      %v2272 = vrcp.pop %v2270
      %v2273 = vmul.f32 %v2270, %v2272
      %v2274 = vsub.f32 1.0, %v2273
      %v2275 = vmul.f32 %v2272, %v2274
      %v2276 = vadd.f32 %v2272, %v2275
      %vm2277 = vweird.f32 %v2270
      %vm2278 = vweird.f32 %v2272
      %vm2279 = vmor %vm2277, %vm2278
      %v2280 = vsel %vm2279, %v2272, %v2276
      %v2281 = vand.u32 2147483647, %v2270
      %vm2282 = vcmp.eq.f32.partialorder %v2281, 8.507059e+37
      %v2283 = vand.u32 %v2270, 2147483648
      %v2284 = vor.u32 1.1754944e-38, %v2283
      %v2285 = vsel %vm2282, %v2284, %v2280
      %v2286 = vmul.f32 1.0, %v2285
      %v2287 = vrcp.pop %v2271
      %v2288 = vmul.f32 %v2271, %v2287
      %v2289 = vsub.f32 1.0, %v2288
      %v2290 = vmul.f32 %v2287, %v2289
      %v2291 = vadd.f32 %v2287, %v2290
      %vm2292 = vweird.f32 %v2271
      %vm2293 = vweird.f32 %v2287
      %vm2294 = vmor %vm2292, %vm2293
      %v2295 = vsel %vm2294, %v2287, %v2291
      %v2296 = vand.u32 2147483647, %v2271
      %vm2297 = vcmp.eq.f32.partialorder %v2296, 8.507059e+37
      %v2298 = vand.u32 %v2271, 2147483648
      %v2299 = vor.u32 1.1754944e-38, %v2298
      %v2300 = vsel %vm2297, %v2299, %v2295
      %v2301 = vmul.f32 1.0, %v2300
      %v2302 = vxor.u32 %v2258, 2147483648
      %v2303 = vxor.u32 %v2259, 2147483648
      %v2304 = vmul.f32 %v2302, 1.442695
      %v2305 = vpow.pop %v2304
      %v2306 = vmul.f32 %v2303, 1.442695
      %v2307 = vpow.pop %v2306
      %v2308 = vadd.f32 %v2305, 1.0
      %v2309 = vadd.f32 %v2307, 1.0
      %v2310 = vrcp.pop %v2308
      %v2311 = vmul.f32 %v2308, %v2310
      %v2312 = vsub.f32 1.0, %v2311
      %v2313 = vmul.f32 %v2310, %v2312
      %v2314 = vadd.f32 %v2310, %v2313
      %vm2315 = vweird.f32 %v2308
      %vm2316 = vweird.f32 %v2310
      %vm2317 = vmor %vm2315, %vm2316
      %v2318 = vsel %vm2317, %v2310, %v2314
      %v2319 = vand.u32 2147483647, %v2308
      %vm2320 = vcmp.eq.f32.partialorder %v2319, 8.507059e+37
      %v2321 = vand.u32 %v2308, 2147483648
      %v2322 = vor.u32 1.1754944e-38, %v2321
      %v2323 = vsel %vm2320, %v2322, %v2318
      %v2324 = vmul.f32 1.0, %v2323
      %v2325 = vrcp.pop %v2309
      %v2326 = vmul.f32 %v2309, %v2325
      %v2327 = vsub.f32 1.0, %v2326
      %v2328 = vmul.f32 %v2325, %v2327
      %v2329 = vadd.f32 %v2325, %v2328
      %vm2330 = vweird.f32 %v2309
      %vm2331 = vweird.f32 %v2325
      %vm2332 = vmor %vm2330, %vm2331
      %v2333 = vsel %vm2332, %v2325, %v2329
      %v2334 = vand.u32 2147483647, %v2309
      %vm2335 = vcmp.eq.f32.partialorder %v2334, 8.507059e+37
      %v2336 = vand.u32 %v2309, 2147483648
      %v2337 = vor.u32 1.1754944e-38, %v2336
      %v2338 = vsel %vm2335, %v2337, %v2333
      %v2339 = vmul.f32 1.0, %v2338
      %v2340 = vtanh.pop %v2260
      %v2341 = vtanh.pop %v2261
      %v2342 = vxor.u32 %v2262, 2147483648
      %v2343 = vxor.u32 %v2263, 2147483648
      %v2344 = vmul.f32 %v2342, 1.442695
      %v2345 = vpow.pop %v2344
      %v2346 = vmul.f32 %v2343, 1.442695
      %v2347 = vpow.pop %v2346
      %v2348 = vadd.f32 %v2345, 1.0
      %v2349 = vadd.f32 %v2347, 1.0
      %v2350 = vrcp.pop %v2348
      %v2351 = vmul.f32 %v2348, %v2350
      %v2352 = vsub.f32 1.0, %v2351
      %v2353 = vmul.f32 %v2350, %v2352
      %v2354 = vadd.f32 %v2350, %v2353
      %vm2355 = vweird.f32 %v2348
      %vm2356 = vweird.f32 %v2350
      %vm2357 = vmor %vm2355, %vm2356
      %v2358 = vsel %vm2357, %v2350, %v2354
      %v2359 = vand.u32 2147483647, %v2348
      %vm2360 = vcmp.eq.f32.partialorder %v2359, 8.507059e+37
      %v2361 = vand.u32 %v2348, 2147483648
      %v2362 = vor.u32 1.1754944e-38, %v2361
      %v2363 = vsel %vm2360, %v2362, %v2358
      %v2364 = vmul.f32 1.0, %v2363
      %v2365 = vrcp.pop %v2349
      %v2366 = vmul.f32 %v2349, %v2365
      %v2367 = vsub.f32 1.0, %v2366
      %v2368 = vmul.f32 %v2365, %v2367
      %v2369 = vadd.f32 %v2365, %v2368
      %vm2370 = vweird.f32 %v2349
      %vm2371 = vweird.f32 %v2365
      %vm2372 = vmor %vm2370, %vm2371
      %v2373 = vsel %vm2372, %v2365, %v2369
      %v2374 = vand.u32 2147483647, %v2349
      %vm2375 = vcmp.eq.f32.partialorder %v2374, 8.507059e+37
      %v2376 = vand.u32 %v2349, 2147483648
      %v2377 = vor.u32 1.1754944e-38, %v2376
      %v2378 = vsel %vm2375, %v2377, %v2373
      %v2379 = vmul.f32 1.0, %v2378
      %v2380 = vld [vmem:[%s294] sm:$0xff]
      %v2381 = vld [vmem:[%s294 + $0x8] sm:$0xff]
      %v2382 = vmul.f32 %v2324, %v2380
      %v2383 = vmul.f32 %v2339, %v2381
      %v2384 = vmul.f32 %v2286, %v2340
      %v2385 = vmul.f32 %v2301, %v2341
      %v2386 = vadd.f32 %v2382, %v2384
      %v2387 = vadd.f32 %v2383, %v2385
      %v2388 = vtanh.pop %v2386
      %v2389 = vtanh.pop %v2387
      %v2390 = vmul.f32 %v2364, %v2388
      %v2391 = vmul.f32 %v2379, %v2389
      %2392 = vst [vmem:[%s304] sm:$0xff] %v2386
      %2393 = vst [vmem:[%s304 + $0x8] sm:$0xff] %v2387
      %2394 = vst [vmem:[%s299] sm:$0xff] %v2390
      %2395 = vst [vmem:[%s299 + $0x8] sm:$0xff] %v2391
      %p2396 = scmp.lt.s32.totalorder %s18, 1
      %s2397 = scalar_select %p2396, %s18, 1
      %s2398 = smul.addr %s2397, 2
      %s2399 = smul.addr %s2398, 8
      %s2400 = scalar_lea.vmem %s5, %s2399
      %p2401 = scmp.lt.s32.totalorder %s18, 1
      %s2402 = scalar_select %p2401, %s18, 1
      %s2403 = smul.addr %s2402, 2
      %s2404 = smul.addr %s2403, 8
      %s2405 = scalar_lea.vmem %s6, %s2404
      // Predicated region
      $region41: #{conv_lstm_cell.1} parent=39 // pred_check
        %p2406 = pneg %p156
      $region42: #{conv_lstm_cell.1} parent=39 // pred_check_branch
        %2408 = sbr.rel (%p2406) target = $region44
      $region43: #{conv_lstm_cell.1} parent=39 // pred_region
        _
      $region44: #{conv_lstm_cell.1} parent=39 // pred_fallthru
        _
      // Predicated region
      $region45: #{conv_lstm_cell.1} parent=39 // pred_check
        %p2409 = pneg %p182
      $region46: #{conv_lstm_cell.1} parent=39 // pred_check_branch
        %2411 = sbr.rel (%p2409) target = $region48
      $region47: #{conv_lstm_cell.1} parent=39 // pred_region
        _
      $region48: #{conv_lstm_cell.1} parent=39 // pred_fallthru
        _
    $region40: #{conv_lstm_cell.1} parent=5 // pred_fallthru
      _
    %p2412 = scmp.le.s32.totalorder 2, %s13
    // Predicated region
    $region49: #{conv_lstm_cell.1} parent=5 // pred_check
      %p2413 = pneg %p2412
    $region50: #{conv_lstm_cell.1} parent=5 // pred_check_branch
      %2415 = sbr.rel (%p2413) target = $region52
    $region51: #{conv_lstm_cell.1} parent=5 // pred_region
      %s2416 = ssub.s32 %s13, 2
      // Predicated region
      $region53: #{conv_lstm_cell.1} parent=51 // pred_check
        %p2417 = pneg %p162
      $region54: #{conv_lstm_cell.1} parent=51 // pred_check_branch
        %2419 = sbr.rel (%p2417) target = $region56
      $region55: #{conv_lstm_cell.1} parent=51 // pred_region
        %p2420 = scmp.lt.s32.totalorder %s19, 1
        %s2421 = scalar_select %p2420, %s19, 1
        %s2422 = smul.addr %s2421, 2
        %s2423 = smul.addr %s2422, 8
        %s2424 = scalar_lea.vmem %s5, %s2423
      $region56: #{conv_lstm_cell.1} parent=51 // pred_fallthru
        _
      // Predicated region
      $region57: #{conv_lstm_cell.1} parent=51 // pred_check
        %p2425 = pneg %p188
      $region58: #{conv_lstm_cell.1} parent=51 // pred_check_branch
        %2427 = sbr.rel (%p2425) target = $region60
      $region59: #{conv_lstm_cell.1} parent=51 // pred_region
        %p2428 = scmp.lt.s32.totalorder %s19, 1
        %s2429 = scalar_select %p2428, %s19, 1
        %s2430 = smul.addr %s2429, 2
        %s2431 = smul.addr %s2430, 8
        %s2432 = scalar_lea.vmem %s6, %s2431
      $region60: #{conv_lstm_cell.1} parent=51 // pred_fallthru
        _
    $region52: #{conv_lstm_cell.1} parent=5 // pred_fallthru
      _
  $region6: #{conv_lstm_cell.1} parent=0 // loop_footer
    %s17 = sadd.s32 1, %s13
  $region7: #{conv_lstm_cell.1} parent=0 // loop_footer_branch
    %12 = sbr.rel target = $region3
  $region8: #{conv_lstm_cell.1} parent=0 // loop_exit
    _

</llo_original>
